<compile_context>
chip_gen: v5e
topology: v5e:2x2
jax: 0.10.0
libtpu: 0.0.40
codegen_flags: <defaults>
</compile_context>

<pallas_src>
import jax
import jax.numpy as jnp
from jax.experimental import pallas as pl
from jax.experimental.pallas import tpu as pltpu


# ------------------------------- Pallas kernels ---------------------------------

def _conv1_kernel(a_ref, w_ref, b_ref, o_ref):
    """Per-batch conv1 as matmul: o = relu(w @ a + b).
    a:(1,K1,M1)  w:(ch,K1)  b:(ch,1)  o:(1,ch,M1);  lane axis = M1 = Ho*Wo."""
    h = jnp.dot(w_ref[...], a_ref[0], preferred_element_type=jnp.float32)
    o_ref[0] = jnp.maximum(h + b_ref[...], 0.0).astype(o_ref.dtype)


def _tail_kernel(a2_ref, w2_ref, b2_ref, w3_ref, b3_ref, wmu_ref, bmu_ref, o_ref):
    """Fused conv2 + ReLU + conv3 + ReLU + conv_mu for one batch element.
    a2:(1,K2,121) w2:(2ch,K2) b2:(2ch,1) w3:(2ch,121,32ch) b3:(1,32ch)
    wmu:(32ch,z)  bmu:(1,z)   o:(1,1,z).  All intermediates stay in VMEM."""
    a2 = a2_ref[0]                                               # (K2, 121)
    h2 = jnp.dot(w2_ref[...], a2, preferred_element_type=jnp.float32) + b2_ref[...]
    h2 = jnp.maximum(h2, 0.0)                                    # (2ch, 121)

    # conv3 (11x11, valid, -> 1x1): contract over (channel, spatial) as a static
    # unrolled sum of (1,121)@(121,32ch) dots — avoids any in-kernel reshape.
    acc = b3_ref[...]                                            # (1, 32ch)
    for c in range(w3_ref.shape[0]):                             # 2ch iterations
        acc = acc + jnp.dot(h2[c:c + 1, :], w3_ref[c],
                            preferred_element_type=jnp.float32)
    h3 = jnp.maximum(acc, 0.0)                                   # (1, 32ch)

    # conv_mu: 1x1 conv == plain matmul, no ReLU.
    out = jnp.dot(h3, wmu_ref[...], preferred_element_type=jnp.float32) + bmu_ref[...]
    o_ref[0] = out.astype(o_ref.dtype)                           # (1, z)


# ------------------------------- pallas_call wrappers ----------------------------

def _conv1_call(a1, w1p, b1c):
    B, K1, M1 = a1.shape
    ch = w1p.shape[0]
    return pl.pallas_call(
        _conv1_kernel,
        grid=(B,),
        in_specs=[
            pl.BlockSpec((1, K1, M1), lambda b: (b, 0, 0)),
            pl.BlockSpec((ch, K1), lambda b: (0, 0)),
            pl.BlockSpec((ch, 1), lambda b: (0, 0)),
        ],
        out_specs=pl.BlockSpec((1, ch, M1), lambda b: (b, 0, 0)),
        out_shape=jax.ShapeDtypeStruct((B, ch, M1), jnp.float32),
        compiler_params=pltpu.CompilerParams(dimension_semantics=("parallel",)),
    )(a1, w1p, b1c)


def _tail_call(a2, w2p, b2c, w3p, b3r, wmup, bmur):
    B, K2, S2 = a2.shape
    ch2 = w2p.shape[0]
    c3 = w3p.shape[2]
    z = wmup.shape[1]
    return pl.pallas_call(
        _tail_kernel,
        grid=(B,),
        in_specs=[
            pl.BlockSpec((1, K2, S2), lambda b: (b, 0, 0)),
            pl.BlockSpec((ch2, K2), lambda b: (0, 0)),
            pl.BlockSpec((ch2, 1), lambda b: (0, 0)),
            pl.BlockSpec((ch2, S2, c3), lambda b: (0, 0, 0)),
            pl.BlockSpec((1, c3), lambda b: (0, 0)),
            pl.BlockSpec((c3, z), lambda b: (0, 0)),
            pl.BlockSpec((1, z), lambda b: (0, 0)),
        ],
        out_specs=pl.BlockSpec((1, 1, z), lambda b: (b, 0, 0)),
        out_shape=jax.ShapeDtypeStruct((B, 1, z), jnp.float32),
        compiler_params=pltpu.CompilerParams(dimension_semantics=("parallel",)),
    )(a2, w2p, b2c, w3p, b3r, wmup, bmur)


# ------------------------------- XLA-side glue -----------------------------------

def _im2col_nchw(x, kh, kw, sh, sw):
    """(B,C,H,W) -> (B, C*kh*kw, Ho*Wo) with K ordered (c, i, j) to match the
    PyTorch OIHW weight flatten.  Runs fused under jax.jit (layout only)."""
    B, C, H, W = x.shape
    Ho = (H - kh) // sh + 1
    Wo = (W - kw) // sw + 1
    taps = []
    for i in range(kh):
        for j in range(kw):
            taps.append(x[:, :, i:i + sh * (Ho - 1) + 1:sh,
                              j:j + sw * (Wo - 1) + 1:sw])
    p = jnp.stack(taps, axis=2)                       # (B, C, kh*kw, Ho, Wo)
    return p.reshape(B, C * kh * kw, Ho * Wo), (Ho, Wo)


def prepare_params(params):
    """One-time weight packing into the exact matrices the kernels consume."""
    ch = params["w1"].shape[0]
    ch2 = params["w2"].shape[0]
    c3 = params["w3"].shape[0]
    z = params["wmu"].shape[0]
    return {
        "w1p": params["w1"].reshape(ch, -1),                               # (ch, Cin*64)
        "b1c": params["b1"].reshape(ch, 1),
        "w2p": params["w2"].reshape(ch2, -1),                              # (2ch, ch*16)
        "b2c": params["b2"].reshape(ch2, 1),
        "w3p": jnp.transpose(params["w3"].reshape(c3, ch2, -1), (1, 2, 0)),  # (2ch,121,32ch)
        "b3r": params["b3"].reshape(1, c3),
        "wmup": jnp.transpose(params["wmu"].reshape(z, c3)),               # (32ch, z)
        "bmur": params["bmu"].reshape(1, z),
    }


@jax.jit
def tencoder_forward(x_nchw, packed):
    """Pallas implementation of TEncoder.forward.  x_nchw: (B, Cin, 84, 84) f32."""
    B = x_nchw.shape[0]
    ch = packed["w1p"].shape[0]
    z = packed["wmup"].shape[1]

    # ZeroPad2d((2,2,2,2)) + Conv2d(cin, ch, 8, s4) + ReLU  -> kernel A
    xp = jnp.pad(x_nchw, ((0, 0), (0, 0), (2, 2), (2, 2)))
    a1, (h1o, w1o) = _im2col_nchw(xp, 8, 8, 4, 4)
    h1 = _conv1_call(a1, packed["w1p"], packed["b1c"])          # (B, ch, 441)

    # ZeroPad2d((1,2,1,2)) + conv2 + ReLU + conv3 + ReLU + conv_mu -> kernel B
    h1 = h1.reshape(B, ch, h1o, w1o)
    h1p = jnp.pad(h1, ((0, 0), (0, 0), (1, 2), (1, 2)))
    a2, _ = _im2col_nchw(h1p, 4, 4, 2, 2)                       # (B, ch*16, 121)
    out = _tail_call(a2, packed["w2p"], packed["b2c"], packed["w3p"],
                     packed["b3r"], packed["wmup"], packed["bmur"])  # (B, 1, z)

    # torch.flatten(x, start_dim=1) on the (B, z, 1, 1) result
    return out.reshape(B, z)


# ----------------------------- pure-JAX reference --------------------------------

def _ref_forward(x, p):
    def conv(x, w, b, stride, pad):
        y = jax.lax.conv_general_dilated(
            x, w, window_strides=stride, padding=pad,
            dimension_numbers=("NCHW", "OIHW", "NCHW"))
        return y + b[None, :, None, None]

    y = jax.nn.relu(conv(x, p["w1"], p["b1"], (4, 4), [(2, 2), (2, 2)]))
    y = jax.nn.relu(conv(y, p["w2"], p["b2"], (2, 2), [(1, 2), (1, 2)]))
    y = jax.nn.relu(conv(y, p["w3"], p["b3"], (1, 1), [(0, 0), (0, 0)]))
    y = conv(y, p["wmu"], p["bmu"], (1, 1), [(0, 0), (0, 0)])
    return y.reshape(y.shape[0], -1)


# ----------------------------------- main ----------------------------------------

if __name__ == "__main__":
    # Small channel counts; spatial must be 84x84 (minimum that keeps the 11x11
    # conv valid — the classic Atari geometry this module was designed for).
    B, channel_in, H, W = 2, 3, 84, 84
    ch, z = 4, 8

    key = jax.random.PRNGKey(0)
    ks = jax.random.split(key, 9)

    def _init(k, shape, fan_in):
        return (jax.random.normal(k, shape, jnp.float32) / jnp.sqrt(fan_in)).astype(
            jnp.float32)

    params = {
        "w1": _init(ks[0], (ch, channel_in, 8, 8), channel_in * 64),
        "b1": _init(ks[1], (ch,), channel_in * 64),
        "w2": _init(ks[2], (ch * 2, ch, 4, 4), ch * 16),
        "b2": _init(ks[3], (ch * 2,), ch * 16),
        "w3": _init(ks[4], (ch * 32, ch * 2, 11, 11), ch * 2 * 121),
        "b3": _init(ks[5], (ch * 32,), ch * 2 * 121),
        "wmu": _init(ks[6], (z, ch * 32, 1, 1), ch * 32),
        "bmu": _init(ks[7], (z,), ch * 32),
    }

    x = jax.random.normal(ks[8], (B, channel_in, H, W), jnp.float32)

    packed = jax.tree_util.tree_map(lambda a: a, prepare_params(params))  # packed once

    out = jax.block_until_ready(tencoder_forward(x, packed))
    ref = jax.block_until_ready(_ref_forward(x, params))

    assert out.shape == (B, z), out.shape
    if not jnp.allclose(out, ref, rtol=2e-3, atol=2e-3):
        raise AssertionError("Pallas TEncoder output mismatch vs JAX reference")

    print("KERNEL_OK")
</pallas_src>

<mosaic_0001>
module attributes {stable_mosaic.version = 11 : i64} {
  func.func @_conv1_kernel(%arg0: i32, %arg1: memref<1x192x441xf32, #tpu.memory_space<vmem>>, %arg2: memref<4x192xf32, #tpu.memory_space<vmem>>, %arg3: memref<4x1xf32, #tpu.memory_space<vmem>>, %arg4: memref<1x4x441xf32, #tpu.memory_space<vmem>>) attributes {dimension_semantics = [#tpu.dimension_semantics<parallel>], iteration_bounds = array<i64: 2>, scalar_prefetch = 0 : i64, scratch_operands = 0 : i64, tpu.core_type = #tpu.core_type<tc>, window_params = [{transform_indices = @transform_0, window_bounds = array<i64: 1, 192, 441>}, {pipeline_mode = #tpu.pipeline_mode<synchronous>, transform_indices = @transform_1, window_bounds = array<i64: 4, 192>}, {pipeline_mode = #tpu.pipeline_mode<synchronous>, transform_indices = @transform_2, window_bounds = array<i64: 4, 1>}, {transform_indices = @transform_3, window_bounds = array<i64: 1, 4, 441>}]} {
    %c0 = arith.constant 0 : index
    %c0_0 = arith.constant 0 : index
    %0 = vector.load %arg2[%c0, %c0_0] : memref<4x192xf32, #tpu.memory_space<vmem>>, vector<4x192xf32>
    %c0_1 = arith.constant 0 : index
    %c0_2 = arith.constant 0 : index
    %c0_3 = arith.constant 0 : index
    %1 = vector.load %arg1[%c0_1, %c0_2, %c0_3] : memref<1x192x441xf32, #tpu.memory_space<vmem>>, vector<1x192x441xf32>
    %2 = vector.shape_cast %1 : vector<1x192x441xf32> to vector<192x441xf32>
    %cst = arith.constant dense<0.000000e+00> : vector<4x441xf32>
    %3 = tpu.matmul %0, %2, %cst {dimension_numbers = #tpu.dot_dimension_numbers<[1], [0], [0], [1], [0, 0, 1, 1], [], []>} : vector<4x192xf32>, vector<192x441xf32>, vector<4x441xf32> -> vector<4x441xf32>
    %c0_4 = arith.constant 0 : index
    %c0_5 = arith.constant 0 : index
    %4 = vector.load %arg3[%c0_4, %c0_5] : memref<4x1xf32, #tpu.memory_space<vmem>>, vector<4x1xf32>
    %5 = vector.broadcast %4 : vector<4x1xf32> to vector<4x441xf32>
    %6 = arith.addf %3, %5 : vector<4x441xf32>
    %cst_6 = arith.constant 0.000000e+00 : f32
    %7 = vector.broadcast %cst_6 : f32 to vector<4x441xf32>
    %8 = arith.maximumf %6, %7 : vector<4x441xf32>
    %c0_7 = arith.constant 0 : index
    %c0_8 = arith.constant 0 : index
    %c0_9 = arith.constant 0 : index
    %9 = vector.load %arg4[%c0_7, %c0_8, %c0_9] : memref<1x4x441xf32, #tpu.memory_space<vmem>>, vector<1x4x441xf32>
    %10 = vector.shape_cast %9 : vector<1x4x441xf32> to vector<4x441xf32>
    %11 = vector.shape_cast %8 : vector<4x441xf32> to vector<1x4x441xf32>
    tpu.vector_store %arg4[%c0_7, %c0_8, %c0_9], %11 {strides = array<i32>} : memref<1x4x441xf32, #tpu.memory_space<vmem>>, vector<1x4x441xf32>,
    return
  }
  func.func @transform_0(%arg0: i32) -> (i32, i32, i32) {
    %c0_i32 = arith.constant 0 : i32
    %c0_i32_0 = arith.constant 0 : i32
    %c0_i32_1 = arith.constant 0 : i32
    return %arg0, %c0_i32, %c0_i32_0 : i32, i32, i32
  }
  func.func @transform_1(%arg0: i32) -> (i32, i32) {
    %c0_i32 = arith.constant 0 : i32
    %c0_i32_0 = arith.constant 0 : i32
    %c0_i32_1 = arith.constant 0 : i32
    return %c0_i32, %c0_i32_0 : i32, i32
  }
  func.func @transform_2(%arg0: i32) -> (i32, i32) {
    %c0_i32 = arith.constant 0 : i32
    %c0_i32_0 = arith.constant 0 : i32
    %c0_i32_1 = arith.constant 0 : i32
    return %c0_i32, %c0_i32_0 : i32, i32
  }
  func.func @transform_3(%arg0: i32) -> (i32, i32, i32) {
    %c0_i32 = arith.constant 0 : i32
    %c0_i32_0 = arith.constant 0 : i32
    %c0_i32_1 = arith.constant 0 : i32
    return %arg0, %c0_i32, %c0_i32_0 : i32, i32, i32
  }
}

module attributes {stable_mosaic.version = 11 : i64} {
  func.func @_tail_kernel(%arg0: i32, %arg1: memref<1x64x121xf32, #tpu.memory_space<vmem>>, %arg2: memref<8x64xf32, #tpu.memory_space<vmem>>, %arg3: memref<8x1xf32, #tpu.memory_space<vmem>>, %arg4: memref<8x121x128xf32, #tpu.memory_space<vmem>>, %arg5: memref<1x128xf32, #tpu.memory_space<vmem>>, %arg6: memref<128x8xf32, #tpu.memory_space<vmem>>, %arg7: memref<1x8xf32, #tpu.memory_space<vmem>>, %arg8: memref<1x1x8xf32, #tpu.memory_space<vmem>>) attributes {dimension_semantics = [#tpu.dimension_semantics<parallel>], iteration_bounds = array<i64: 2>, scalar_prefetch = 0 : i64, scratch_operands = 0 : i64, tpu.core_type = #tpu.core_type<tc>, window_params = [{transform_indices = @transform_0, window_bounds = array<i64: 1, 64, 121>}, {pipeline_mode = #tpu.pipeline_mode<synchronous>, transform_indices = @transform_1, window_bounds = array<i64: 8, 64>}, {pipeline_mode = #tpu.pipeline_mode<synchronous>, transform_indices = @transform_2, window_bounds = array<i64: 8, 1>}, {pipeline_mode = #tpu.pipeline_mode<synchronous>, transform_indices = @transform_3, window_bounds = array<i64: 8, 121, 128>}, {pipeline_mode = #tpu.pipeline_mode<synchronous>, transform_indices = @transform_4, window_bounds = array<i64: 1, 128>}, {pipeline_mode = #tpu.pipeline_mode<synchronous>, transform_indices = @transform_5, window_bounds = array<i64: 128, 8>}, {pipeline_mode = #tpu.pipeline_mode<synchronous>, transform_indices = @transform_6, window_bounds = array<i64: 1, 8>}, {transform_indices = @transform_7, window_bounds = array<i64: 1, 1, 8>}]} {
    %c0 = arith.constant 0 : index
    %c0_0 = arith.constant 0 : index
    %c0_1 = arith.constant 0 : index
    %0 = vector.load %arg1[%c0, %c0_0, %c0_1] : memref<1x64x121xf32, #tpu.memory_space<vmem>>, vector<1x64x121xf32>
    %1 = vector.shape_cast %0 : vector<1x64x121xf32> to vector<64x121xf32>
    %c0_2 = arith.constant 0 : index
    %c0_3 = arith.constant 0 : index
    %2 = vector.load %arg2[%c0_2, %c0_3] : memref<8x64xf32, #tpu.memory_space<vmem>>, vector<8x64xf32>
    %cst = arith.constant dense<0.000000e+00> : vector<8x121xf32>
    %3 = tpu.matmul %2, %1, %cst {dimension_numbers = #tpu.dot_dimension_numbers<[1], [0], [0], [1], [0, 0, 1, 1], [], []>} : vector<8x64xf32>, vector<64x121xf32>, vector<8x121xf32> -> vector<8x121xf32>
    %c0_4 = arith.constant 0 : index
    %c0_5 = arith.constant 0 : index
    %4 = vector.load %arg3[%c0_4, %c0_5] : memref<8x1xf32, #tpu.memory_space<vmem>>, vector<8x1xf32>
    %5 = vector.broadcast %4 : vector<8x1xf32> to vector<8x121xf32>
    %6 = arith.addf %3, %5 : vector<8x121xf32>
    %cst_6 = arith.constant 0.000000e+00 : f32
    %7 = vector.broadcast %cst_6 : f32 to vector<8x121xf32>
    %8 = arith.maximumf %6, %7 : vector<8x121xf32>
    %c0_7 = arith.constant 0 : index
    %c0_8 = arith.constant 0 : index
    %9 = vector.load %arg5[%c0_7, %c0_8] : memref<1x128xf32, #tpu.memory_space<vmem>>, vector<1x128xf32>
    %10 = vector.extract_strided_slice %8 {offsets = [0, 0], sizes = [1, 121], strides = [1, 1]} : vector<8x121xf32> to vector<1x121xf32>
    %c0_9 = arith.constant 0 : index
    %c0_10 = arith.constant 0 : index
    %c0_11 = arith.constant 0 : index
    %11 = vector.load %arg4[%c0_9, %c0_10, %c0_11] : memref<8x121x128xf32, #tpu.memory_space<vmem>>, vector<1x121x128xf32>
    %12 = vector.shape_cast %11 : vector<1x121x128xf32> to vector<121x128xf32>
    %cst_12 = arith.constant dense<0.000000e+00> : vector<1x128xf32>
    %13 = tpu.matmul %10, %12, %cst_12 {dimension_numbers = #tpu.dot_dimension_numbers<[1], [0], [0], [1], [0, 0, 1, 1], [], []>} : vector<1x121xf32>, vector<121x128xf32>, vector<1x128xf32> -> vector<1x128xf32>
    %14 = arith.addf %9, %13 : vector<1x128xf32>
    %15 = vector.extract_strided_slice %8 {offsets = [1, 0], sizes = [1, 121], strides = [1, 1]} : vector<8x121xf32> to vector<1x121xf32>
    %c1 = arith.constant 1 : index
    %c0_13 = arith.constant 0 : index
    %c0_14 = arith.constant 0 : index
    %16 = vector.load %arg4[%c1, %c0_13, %c0_14] : memref<8x121x128xf32, #tpu.memory_space<vmem>>, vector<1x121x128xf32>
    %17 = vector.shape_cast %16 : vector<1x121x128xf32> to vector<121x128xf32>
    %cst_15 = arith.constant dense<0.000000e+00> : vector<1x128xf32>
    %18 = tpu.matmul %15, %17, %cst_15 {dimension_numbers = #tpu.dot_dimension_numbers<[1], [0], [0], [1], [0, 0, 1, 1], [], []>} : vector<1x121xf32>, vector<121x128xf32>, vector<1x128xf32> -> vector<1x128xf32>
    %19 = arith.addf %14, %18 : vector<1x128xf32>
    %20 = vector.extract_strided_slice %8 {offsets = [2, 0], sizes = [1, 121], strides = [1, 1]} : vector<8x121xf32> to vector<1x121xf32>
    %c2 = arith.constant 2 : index
    %c0_16 = arith.constant 0 : index
    %c0_17 = arith.constant 0 : index
    %21 = vector.load %arg4[%c2, %c0_16, %c0_17] : memref<8x121x128xf32, #tpu.memory_space<vmem>>, vector<1x121x128xf32>
    %22 = vector.shape_cast %21 : vector<1x121x128xf32> to vector<121x128xf32>
    %cst_18 = arith.constant dense<0.000000e+00> : vector<1x128xf32>
    %23 = tpu.matmul %20, %22, %cst_18 {dimension_numbers = #tpu.dot_dimension_numbers<[1], [0], [0], [1], [0, 0, 1, 1], [], []>} : vector<1x121xf32>, vector<121x128xf32>, vector<1x128xf32> -> vector<1x128xf32>
    %24 = arith.addf %19, %23 : vector<1x128xf32>
    %25 = vector.extract_strided_slice %8 {offsets = [3, 0], sizes = [1, 121], strides = [1, 1]} : vector<8x121xf32> to vector<1x121xf32>
    %c3 = arith.constant 3 : index
    %c0_19 = arith.constant 0 : index
    %c0_20 = arith.constant 0 : index
    %26 = vector.load %arg4[%c3, %c0_19, %c0_20] : memref<8x121x128xf32, #tpu.memory_space<vmem>>, vector<1x121x128xf32>
    %27 = vector.shape_cast %26 : vector<1x121x128xf32> to vector<121x128xf32>
    %cst_21 = arith.constant dense<0.000000e+00> : vector<1x128xf32>
    %28 = tpu.matmul %25, %27, %cst_21 {dimension_numbers = #tpu.dot_dimension_numbers<[1], [0], [0], [1], [0, 0, 1, 1], [], []>} : vector<1x121xf32>, vector<121x128xf32>, vector<1x128xf32> -> vector<1x128xf32>
    %29 = arith.addf %24, %28 : vector<1x128xf32>
    %30 = vector.extract_strided_slice %8 {offsets = [4, 0], sizes = [1, 121], strides = [1, 1]} : vector<8x121xf32> to vector<1x121xf32>
    %c4 = arith.constant 4 : index
    %c0_22 = arith.constant 0 : index
    %c0_23 = arith.constant 0 : index
    %31 = vector.load %arg4[%c4, %c0_22, %c0_23] : memref<8x121x128xf32, #tpu.memory_space<vmem>>, vector<1x121x128xf32>
    %32 = vector.shape_cast %31 : vector<1x121x128xf32> to vector<121x128xf32>
    %cst_24 = arith.constant dense<0.000000e+00> : vector<1x128xf32>
    %33 = tpu.matmul %30, %32, %cst_24 {dimension_numbers = #tpu.dot_dimension_numbers<[1], [0], [0], [1], [0, 0, 1, 1], [], []>} : vector<1x121xf32>, vector<121x128xf32>, vector<1x128xf32> -> vector<1x128xf32>
    %34 = arith.addf %29, %33 : vector<1x128xf32>
    %35 = vector.extract_strided_slice %8 {offsets = [5, 0], sizes = [1, 121], strides = [1, 1]} : vector<8x121xf32> to vector<1x121xf32>
    %c5 = arith.constant 5 : index
    %c0_25 = arith.constant 0 : index
    %c0_26 = arith.constant 0 : index
    %36 = vector.load %arg4[%c5, %c0_25, %c0_26] : memref<8x121x128xf32, #tpu.memory_space<vmem>>, vector<1x121x128xf32>
    %37 = vector.shape_cast %36 : vector<1x121x128xf32> to vector<121x128xf32>
    %cst_27 = arith.constant dense<0.000000e+00> : vector<1x128xf32>
    %38 = tpu.matmul %35, %37, %cst_27 {dimension_numbers = #tpu.dot_dimension_numbers<[1], [0], [0], [1], [0, 0, 1, 1], [], []>} : vector<1x121xf32>, vector<121x128xf32>, vector<1x128xf32> -> vector<1x128xf32>
    %39 = arith.addf %34, %38 : vector<1x128xf32>
    %40 = vector.extract_strided_slice %8 {offsets = [6, 0], sizes = [1, 121], strides = [1, 1]} : vector<8x121xf32> to vector<1x121xf32>
    %c6 = arith.constant 6 : index
    %c0_28 = arith.constant 0 : index
    %c0_29 = arith.constant 0 : index
    %41 = vector.load %arg4[%c6, %c0_28, %c0_29] : memref<8x121x128xf32, #tpu.memory_space<vmem>>, vector<1x121x128xf32>
    %42 = vector.shape_cast %41 : vector<1x121x128xf32> to vector<121x128xf32>
    %cst_30 = arith.constant dense<0.000000e+00> : vector<1x128xf32>
    %43 = tpu.matmul %40, %42, %cst_30 {dimension_numbers = #tpu.dot_dimension_numbers<[1], [0], [0], [1], [0, 0, 1, 1], [], []>} : vector<1x121xf32>, vector<121x128xf32>, vector<1x128xf32> -> vector<1x128xf32>
    %44 = arith.addf %39, %43 : vector<1x128xf32>
    %45 = vector.extract_strided_slice %8 {offsets = [7, 0], sizes = [1, 121], strides = [1, 1]} : vector<8x121xf32> to vector<1x121xf32>
    %c7 = arith.constant 7 : index
    %c0_31 = arith.constant 0 : index
    %c0_32 = arith.constant 0 : index
    %46 = vector.load %arg4[%c7, %c0_31, %c0_32] : memref<8x121x128xf32, #tpu.memory_space<vmem>>, vector<1x121x128xf32>
    %47 = vector.shape_cast %46 : vector<1x121x128xf32> to vector<121x128xf32>
    %cst_33 = arith.constant dense<0.000000e+00> : vector<1x128xf32>
    %48 = tpu.matmul %45, %47, %cst_33 {dimension_numbers = #tpu.dot_dimension_numbers<[1], [0], [0], [1], [0, 0, 1, 1], [], []>} : vector<1x121xf32>, vector<121x128xf32>, vector<1x128xf32> -> vector<1x128xf32>
    %49 = arith.addf %44, %48 : vector<1x128xf32>
    %cst_34 = arith.constant 0.000000e+00 : f32
    %50 = vector.broadcast %cst_34 : f32 to vector<1x128xf32>
    %51 = arith.maximumf %49, %50 : vector<1x128xf32>
    %c0_35 = arith.constant 0 : index
    %c0_36 = arith.constant 0 : index
    %52 = vector.load %arg6[%c0_35, %c0_36] : memref<128x8xf32, #tpu.memory_space<vmem>>, vector<128x8xf32>
    %cst_37 = arith.constant dense<0.000000e+00> : vector<1x8xf32>
    %53 = tpu.matmul %51, %52, %cst_37 {dimension_numbers = #tpu.dot_dimension_numbers<[1], [0], [0], [1], [0, 0, 1, 1], [], []>} : vector<1x128xf32>, vector<128x8xf32>, vector<1x8xf32> -> vector<1x8xf32>
    %c0_38 = arith.constant 0 : index
    %c0_39 = arith.constant 0 : index
    %54 = vector.load %arg7[%c0_38, %c0_39] : memref<1x8xf32, #tpu.memory_space<vmem>>, vector<1x8xf32>
    %55 = arith.addf %53, %54 : vector<1x8xf32>
    %c0_40 = arith.constant 0 : index
    %c0_41 = arith.constant 0 : index
    %c0_42 = arith.constant 0 : index
    %56 = vector.load %arg8[%c0_40, %c0_41, %c0_42] : memref<1x1x8xf32, #tpu.memory_space<vmem>>, vector<1x1x8xf32>
    %57 = vector.shape_cast %56 : vector<1x1x8xf32> to vector<1x8xf32>
    %58 = vector.shape_cast %55 : vector<1x8xf32> to vector<1x1x8xf32>
    tpu.vector_store %arg8[%c0_40, %c0_41, %c0_42], %58 {strides = array<i32>} : memref<1x1x8xf32, #tpu.memory_space<vmem>>, vector<1x1x8xf32>,
    return
  }
  func.func @transform_0(%arg0: i32) -> (i32, i32, i32) {
    %c0_i32 = arith.constant 0 : i32
    %c0_i32_0 = arith.constant 0 : i32
    %c0_i32_1 = arith.constant 0 : i32
    return %arg0, %c0_i32, %c0_i32_0 : i32, i32, i32
  }
  func.func @transform_1(%arg0: i32) -> (i32, i32) {
    %c0_i32 = arith.constant 0 : i32
    %c0_i32_0 = arith.constant 0 : i32
    %c0_i32_1 = arith.constant 0 : i32
    return %c0_i32, %c0_i32_0 : i32, i32
  }
  func.func @transform_2(%arg0: i32) -> (i32, i32) {
    %c0_i32 = arith.constant 0 : i32
    %c0_i32_0 = arith.constant 0 : i32
    %c0_i32_1 = arith.constant 0 : i32
    return %c0_i32, %c0_i32_0 : i32, i32
  }
  func.func @transform_3(%arg0: i32) -> (i32, i32, i32) {
    %c0_i32 = arith.constant 0 : i32
    %c0_i32_0 = arith.constant 0 : i32
    %c0_i32_1 = arith.constant 0 : i32
    %c0_i32_2 = arith.constant 0 : i32
    return %c0_i32, %c0_i32_0, %c0_i32_1 : i32, i32, i32
  }
  func.func @transform_4(%arg0: i32) -> (i32, i32) {
    %c0_i32 = arith.constant 0 : i32
    %c0_i32_0 = arith.constant 0 : i32
    %c0_i32_1 = arith.constant 0 : i32
    return %c0_i32, %c0_i32_0 : i32, i32
  }
  func.func @transform_5(%arg0: i32) -> (i32, i32) {
    %c0_i32 = arith.constant 0 : i32
    %c0_i32_0 = arith.constant 0 : i32
    %c0_i32_1 = arith.constant 0 : i32
    return %c0_i32, %c0_i32_0 : i32, i32
  }
  func.func @transform_6(%arg0: i32) -> (i32, i32) {
    %c0_i32 = arith.constant 0 : i32
    %c0_i32_0 = arith.constant 0 : i32
    %c0_i32_1 = arith.constant 0 : i32
    return %c0_i32, %c0_i32_0 : i32, i32
  }
  func.func @transform_7(%arg0: i32) -> (i32, i32, i32) {
    %c0_i32 = arith.constant 0 : i32
    %c0_i32_0 = arith.constant 0 : i32
    %c0_i32_1 = arith.constant 0 : i32
    return %arg0, %c0_i32, %c0_i32_0 : i32, i32, i32
  }
}

</mosaic_0001>

<llo_original>
// kernel: tencoder_forward.2
$region0: #{tencoder_forward.2}
  #allocation0 [shape = 'u32[]', space=smem, size = 0x4, offset = 0x4, fixed_abs, tag = 'smem constant byte address 0x4 - core index']
  #allocation1 [shape = 'u32[72,128]{1,0:T(1,128)}', space=vmem, size = 0x9000, scoped, tag = 'internal scratch']
  %s0 = inlined_call_operand.vmem [shape: f32[2,192,441], index: 0, kind: input, shape index: {}]
  %s1 = inlined_call_operand.vmem [shape: f32[4,192], index: 1, kind: input, shape index: {}]
  %s2 = inlined_call_operand.vmem [shape: f32[4,1], index: 2, kind: input, shape index: {}]
  %s3 = inlined_call_operand.vmem [shape: f32[2,4,441], index: 3, kind: output, shape index: {}]
  %s4 = sld [smem:[#allocation0]]
  $region45: #{tencoder_forward.2} parent=0
    _
  %s6 = ssub.s32 1, %s4
  %s7 = scalar_select 0, %s6, %s4
  loop: start=0, step=1, limit=4
  $region2: #{tencoder_forward.2} parent=0 // loop_pre_header
    _
  $region3: #{tencoder_forward.2} parent=0 // loop_header
    %s9 = sphi 0, %s13
    %p10 = scmp.ge.s32.totalorder %s9, 4
    %s19 = sphi 0, %s21
    %s22 = sphi 0, %s19
    %s23 = sphi 0, %s22
    %s39 = sphi 0, %s23
    %s43 = sphi 0, %s43
    %s45 = sphi 0, %s43
    %s46 = sphi 0, %s45
    %s60 = sphi 0, %s46
    %s64 = sphi 0, %s64
    %s66 = sphi 0, %s64
    %s67 = sphi 0, %s66
    %s81 = sphi 0, %s67
    %s87 = sphi 0, %s89
    %s90 = sphi 0, %s87
    %s91 = sphi 0, %s90
    %s107 = sphi 0, %s91
  $region4: #{tencoder_forward.2} parent=0 // loop_header_branch
    %12 = sbr.rel (%p10) target = $region8
  $region5: #{tencoder_forward.2} parent=0 // loop_body
    %s14 = ssub.s32 %s9, 1
    %s15 = ssub.s32 %s9, 2
    %s16 = sadd.s32 %s9, 1
    %s17 = ssub.s32 %s9, %s16
    %p18 = scmp.eq.s32.totalorder %s17, 0
    %s20 = sadd.s32 %s19, 1
    %s21 = scalar_select %p18, %s19, %s20
    %p24 = pneg %p18
    %p25 = scmp.eq.s32.totalorder %s9, 1
    %p26 = por %p24, %p25
    %p27 = scmp.ne.s32.totalorder %s19, %s22
    %p28 = scmp.eq.s32.totalorder %s9, 0
    %p29 = por %p27, %p28
    %p30 = scmp.ne.s32.totalorder %s19, %s22
    %p31 = scmp.eq.s32.totalorder %s14, 1
    %p32 = por %p30, %p31
    %p33 = scmp.ne.s32.totalorder %s22, %s23
    %p34 = scmp.eq.s32.totalorder %s14, 0
    %p35 = por %p33, %p34
    %p36 = scmp.ne.s32.totalorder %s22, %s23
    %p37 = scmp.eq.s32.totalorder %s15, 1
    %p38 = por %p36, %p37
    %p40 = scmp.ne.s32.totalorder %s23, %s39
    %p41 = scmp.eq.s32.totalorder %s15, 0
    %p42 = por %p40, %p41
    %s44 = sadd.s32 %s43, 1
    %p47 = scmp.eq.s32.totalorder %s9, 1
    %p48 = scmp.ne.s32.totalorder %s43, %s45
    %p49 = scmp.eq.s32.totalorder %s9, 0
    %p50 = por %p48, %p49
    %p51 = scmp.ne.s32.totalorder %s43, %s45
    %p52 = scmp.eq.s32.totalorder %s14, 1
    %p53 = por %p51, %p52
    %p54 = scmp.ne.s32.totalorder %s45, %s46
    %p55 = scmp.eq.s32.totalorder %s14, 0
    %p56 = por %p54, %p55
    %p57 = scmp.ne.s32.totalorder %s45, %s46
    %p58 = scmp.eq.s32.totalorder %s15, 1
    %p59 = por %p57, %p58
    %p61 = scmp.ne.s32.totalorder %s46, %s60
    %p62 = scmp.eq.s32.totalorder %s15, 0
    %p63 = por %p61, %p62
    %s65 = sadd.s32 %s64, 1
    %p68 = scmp.eq.s32.totalorder %s9, 1
    %p69 = scmp.ne.s32.totalorder %s64, %s66
    %p70 = scmp.eq.s32.totalorder %s9, 0
    %p71 = por %p69, %p70
    %p72 = scmp.ne.s32.totalorder %s64, %s66
    %p73 = scmp.eq.s32.totalorder %s14, 1
    %p74 = por %p72, %p73
    %p75 = scmp.ne.s32.totalorder %s66, %s67
    %p76 = scmp.eq.s32.totalorder %s14, 0
    %p77 = por %p75, %p76
    %p78 = scmp.ne.s32.totalorder %s66, %s67
    %p79 = scmp.eq.s32.totalorder %s15, 1
    %p80 = por %p78, %p79
    %p82 = scmp.ne.s32.totalorder %s67, %s81
    %p83 = scmp.eq.s32.totalorder %s15, 0
    %p84 = por %p82, %p83
    %s85 = ssub.s32 %s9, %s16
    %p86 = scmp.eq.s32.totalorder %s85, 0
    %s88 = sadd.s32 %s87, 1
    %s89 = scalar_select %p86, %s87, %s88
    %p92 = pneg %p86
    %p93 = scmp.eq.s32.totalorder %s9, 1
    %p94 = por %p92, %p93
    %p95 = scmp.ne.s32.totalorder %s87, %s90
    %p96 = scmp.eq.s32.totalorder %s9, 0
    %p97 = por %p95, %p96
    %p98 = scmp.ne.s32.totalorder %s87, %s90
    %p99 = scmp.eq.s32.totalorder %s14, 1
    %p100 = por %p98, %p99
    %p101 = scmp.ne.s32.totalorder %s90, %s91
    %p102 = scmp.eq.s32.totalorder %s14, 0
    %p103 = por %p101, %p102
    %p104 = scmp.ne.s32.totalorder %s90, %s91
    %p105 = scmp.eq.s32.totalorder %s15, 1
    %p106 = por %p104, %p105
    %p108 = scmp.ne.s32.totalorder %s91, %s107
    %p109 = scmp.eq.s32.totalorder %s15, 0
    %p110 = por %p108, %p109
    %p111 = scmp.le.s32.totalorder 1, %s9
    %p112 = scmp.lt.s32.totalorder %s9, 3
    %p113 = pnand %p111, %p112
    %p114 = pneg %p113
    // Predicated region
    $region9: #{tencoder_forward.2} parent=5 // pred_check
      _
    $region10: #{tencoder_forward.2} parent=5 // pred_check_branch
      %116 = sbr.rel (%p113) target = $region12
    $region11: #{tencoder_forward.2} parent=5 // pred_region
      %s117 = ssub.s32 %s9, 1
      // Predicated region
      $region13: #{tencoder_forward.2} parent=11 // pred_check
        %p118 = pneg %p56
      $region14: #{tencoder_forward.2} parent=11 // pred_check_branch
        %120 = sbr.rel (%p118) target = $region16
      $region15: #{tencoder_forward.2} parent=11 // pred_region
        _
      $region16: #{tencoder_forward.2} parent=11 // pred_fallthru
        _
      // Predicated region
      $region17: #{tencoder_forward.2} parent=11 // pred_check
        %p121 = pneg %p77
      $region18: #{tencoder_forward.2} parent=11 // pred_check_branch
        %123 = sbr.rel (%p121) target = $region20
      $region19: #{tencoder_forward.2} parent=11 // pred_region
        _
      $region20: #{tencoder_forward.2} parent=11 // pred_fallthru
        _
    $region12: #{tencoder_forward.2} parent=5 // pred_fallthru
      _
    %p124 = scmp.lt.s32.totalorder %s9, 2
    // Predicated region
    $region21: #{tencoder_forward.2} parent=5 // pred_check
      %p125 = pneg %p124
    $region22: #{tencoder_forward.2} parent=5 // pred_check_branch
      %127 = sbr.rel (%p125) target = $region24
    $region23: #{tencoder_forward.2} parent=5 // pred_region
      // Predicated region
      $region25: #{tencoder_forward.2} parent=23 // pred_check
        %p128 = pneg %p29
      $region26: #{tencoder_forward.2} parent=23 // pred_check_branch
        %130 = sbr.rel (%p128) target = $region28
      $region27: #{tencoder_forward.2} parent=23 // pred_region
        %p131 = scmp.lt.s32.totalorder %s9, 1
        %s132 = scalar_select %p131, %s9, 1
        %s133 = smul.addr %s132, 96
        %s134 = smul.addr %s133, 8
        %s135 = scalar_lea.vmem %s0, %s134
      $region28: #{tencoder_forward.2} parent=23 // pred_fallthru
        _
    $region24: #{tencoder_forward.2} parent=5 // pred_fallthru
      _
    %p136 = scmp.le.s32.totalorder 1, %s9
    %p137 = scmp.lt.s32.totalorder %s9, 3
    %p138 = pnand %p136, %p137
    %p139 = pneg %p138
    // Predicated region
    $region29: #{tencoder_forward.2} parent=5 // pred_check
      _
    $region30: #{tencoder_forward.2} parent=5 // pred_check_branch
      %141 = sbr.rel (%p138) target = $region32
    $region31: #{tencoder_forward.2} parent=5 // pred_region
      %s142 = ssub.s32 %s9, 1
      %p143 = scmp.lt.s32.totalorder %s14, 1
      %s144 = scalar_select %p143, %s14, 1
      %s145 = smul.addr %s144, 96
      %s146 = smul.addr %s145, 8
      %s147 = scalar_lea.vmem %s0, %s146
      %p148 = pneg %p35
      %p149 = pneg %p32
      %p150 = pneg %p56
      %p151 = pneg %p53
      %p152 = pneg %p77
      %p153 = pneg %p74
      %p154 = pneg %p103
      %p155 = pneg %p100
      %p156 = scmp.lt.s32.totalorder %s14, 1
      %s157 = scalar_select %p156, %s14, 1
      %s158 = smul.addr %s157, 4
      %s159 = smul.addr %s158, 4
      %s160 = scalar_lea.vmem %s3, %s159
      %p161 = scmp.lt.s32.totalorder %s14, 1
      %s162 = scalar_select %p161, %s14, 1
      %s163 = smul.addr %s162, 96
      %s164 = smul.addr %s163, 8
      %s165 = scalar_lea.vmem %s0, %s164
      %p166 = scmp.lt.s32.totalorder %s14, 1
      %s167 = scalar_select %p166, %s14, 1
      %s168 = smul.addr %s167, 4
      %s169 = smul.addr %s168, 4
      %s170 = scalar_lea.vmem %s3, %s169
      %v171 = vld [vmem:[%s1] sm:$0xff]
      %v172 = vld [vmem:[%s165] sm:$0xff]
      %v173 = vld [vmem:[%s165 + $0x8] sm:$0xff]
      %v174 = vld [vmem:[%s165 + $0x10] sm:$0xff]
      %v175 = vld [vmem:[%s165 + $0x18] sm:$0xff]
      %v176 = vld [vmem:[%s165 + $0x20] sm:$0xff]
      %v177 = vld [vmem:[%s165 + $0x28] sm:$0xff]
      %v178 = vld [vmem:[%s165 + $0x30] sm:$0xff]
      %v179 = vld [vmem:[%s165 + $0x38] sm:$0xff]
      %v180 = vld [vmem:[%s165 + $0x40] sm:$0xff]
      %v181 = vld [vmem:[%s165 + $0x48] sm:$0xff]
      %v182 = vld [vmem:[%s165 + $0x50] sm:$0xff]
      %v183 = vld [vmem:[%s165 + $0x58] sm:$0xff]
      %v184 = vld [vmem:[%s165 + $0x60] sm:$0xff]
      %v185 = vld [vmem:[%s165 + $0x68] sm:$0xff]
      %v186 = vld [vmem:[%s165 + $0x70] sm:$0xff]
      %v187 = vld [vmem:[%s165 + $0x78] sm:$0xff]
      %v188 = vld [vmem:[%s165 + $0x80] sm:$0xff]
      %v189 = vld [vmem:[%s165 + $0x88] sm:$0xff]
      %v190 = vld [vmem:[%s165 + $0x90] sm:$0xff]
      %v191 = vld [vmem:[%s165 + $0x98] sm:$0xff]
      %v192 = vld [vmem:[%s165 + $0xa0] sm:$0xff]
      %v193 = vld [vmem:[%s165 + $0xa8] sm:$0xff]
      %v194 = vld [vmem:[%s165 + $0xb0] sm:$0xff]
      %v195 = vld [vmem:[%s165 + $0xb8] sm:$0xff]
      %v196 = vld [vmem:[%s165 + $0xc0] sm:$0xff]
      %v197 = vld [vmem:[%s165 + $0xc8] sm:$0xff]
      %v198 = vld [vmem:[%s165 + $0xd0] sm:$0xff]
      %v199 = vld [vmem:[%s165 + $0xd8] sm:$0xff]
      %v200 = vld [vmem:[%s165 + $0xe0] sm:$0xff]
      %v201 = vld [vmem:[%s165 + $0xe8] sm:$0xff]
      %v202 = vld [vmem:[%s165 + $0xf0] sm:$0xff]
      %v203 = vld [vmem:[%s165 + $0xf8] sm:$0xff]
      %v204 = vld [vmem:[%s165 + $0x100] sm:$0xff]
      %v205 = vld [vmem:[%s165 + $0x108] sm:$0xff]
      %v206 = vld [vmem:[%s165 + $0x110] sm:$0xff]
      %v207 = vld [vmem:[%s165 + $0x118] sm:$0xff]
      %v208 = vld [vmem:[%s165 + $0x120] sm:$0xff]
      %v209 = vld [vmem:[%s165 + $0x128] sm:$0xff]
      %v210 = vld [vmem:[%s165 + $0x130] sm:$0xff]
      %v211 = vld [vmem:[%s165 + $0x138] sm:$0xff]
      %v212 = vld [vmem:[%s165 + $0x140] sm:$0xff]
      %v213 = vld [vmem:[%s165 + $0x148] sm:$0xff]
      %v214 = vld [vmem:[%s165 + $0x150] sm:$0xff]
      %v215 = vld [vmem:[%s165 + $0x158] sm:$0xff]
      %v216 = vld [vmem:[%s165 + $0x160] sm:$0xff]
      %v217 = vld [vmem:[%s165 + $0x168] sm:$0xff]
      %v218 = vld [vmem:[%s165 + $0x170] sm:$0xff]
      %v219 = vld [vmem:[%s165 + $0x178] sm:$0xff]
      %v220 = vld [vmem:[%s165 + $0x180] sm:$0xff]
      %v221 = vld [vmem:[%s165 + $0x188] sm:$0xff]
      %v222 = vld [vmem:[%s165 + $0x190] sm:$0xff]
      %v223 = vld [vmem:[%s165 + $0x198] sm:$0xff]
      %v224 = vld [vmem:[%s165 + $0x1a0] sm:$0xff]
      %v225 = vld [vmem:[%s165 + $0x1a8] sm:$0xff]
      %v226 = vld [vmem:[%s165 + $0x1b0] sm:$0xff]
      %v227 = vld [vmem:[%s165 + $0x1b8] sm:$0xff]
      %v228 = vld [vmem:[%s165 + $0x1c0] sm:$0xff]
      %v229 = vld [vmem:[%s165 + $0x1c8] sm:$0xff]
      %v230 = vld [vmem:[%s165 + $0x1d0] sm:$0xff]
      %v231 = vld [vmem:[%s165 + $0x1d8] sm:$0xff]
      %v232 = vld [vmem:[%s165 + $0x1e0] sm:$0xff]
      %v233 = vld [vmem:[%s165 + $0x1e8] sm:$0xff]
      %v234 = vld [vmem:[%s165 + $0x1f0] sm:$0xff]
      %v235 = vld [vmem:[%s165 + $0x1f8] sm:$0xff]
      %v236 = vld [vmem:[%s165 + $0x200] sm:$0xff]
      %v237 = vld [vmem:[%s165 + $0x208] sm:$0xff]
      %v238 = vld [vmem:[%s165 + $0x210] sm:$0xff]
      %v239 = vld [vmem:[%s165 + $0x218] sm:$0xff]
      %v240 = vld [vmem:[%s165 + $0x220] sm:$0xff]
      %v241 = vld [vmem:[%s165 + $0x228] sm:$0xff]
      %v242 = vld [vmem:[%s165 + $0x230] sm:$0xff]
      %v243 = vld [vmem:[%s165 + $0x238] sm:$0xff]
      %v244 = vld [vmem:[%s165 + $0x240] sm:$0xff]
      %v245 = vld [vmem:[%s165 + $0x248] sm:$0xff]
      %v246 = vld [vmem:[%s165 + $0x250] sm:$0xff]
      %v247 = vld [vmem:[%s165 + $0x258] sm:$0xff]
      %v248 = vld [vmem:[%s165 + $0x260] sm:$0xff]
      %v249 = vld [vmem:[%s165 + $0x268] sm:$0xff]
      %v250 = vld [vmem:[%s165 + $0x270] sm:$0xff]
      %v251 = vld [vmem:[%s165 + $0x278] sm:$0xff]
      %v252 = vld [vmem:[%s165 + $0x280] sm:$0xff]
      %v253 = vld [vmem:[%s165 + $0x288] sm:$0xff]
      %v254 = vld [vmem:[%s165 + $0x290] sm:$0xff]
      %v255 = vld [vmem:[%s165 + $0x298] sm:$0xff]
      %v256 = vld [vmem:[%s165 + $0x2a0] sm:$0xff]
      %v257 = vld [vmem:[%s165 + $0x2a8] sm:$0xff]
      %v258 = vld [vmem:[%s165 + $0x2b0] sm:$0xff]
      %v259 = vld [vmem:[%s165 + $0x2b8] sm:$0xff]
      %v260 = vld [vmem:[%s165 + $0x2c0] sm:$0xff]
      %v261 = vld [vmem:[%s165 + $0x2c8] sm:$0xff]
      %v262 = vld [vmem:[%s165 + $0x2d0] sm:$0xff]
      %v263 = vld [vmem:[%s165 + $0x2d8] sm:$0xff]
      %v264 = vld [vmem:[%s165 + $0x2e0] sm:$0xff]
      %v265 = vld [vmem:[%s165 + $0x2e8] sm:$0xff]
      %v266 = vld [vmem:[%s165 + $0x2f0] sm:$0xff]
      %v267 = vld [vmem:[%s165 + $0x2f8] sm:$0xff]
      %v268 = vld [vmem:[%s2] sm:$0xf]
      %270 = vset.pattern.permute.xlu0 0
      %271 = vperm.xlu0 %270, %v268
      %v272 = vpop.permute.xlu0 %271
      %275 = vst [vmem:[#allocation1] ss:$2 sm:$0xff] %v171
      %v276 = vld.sshfl [vmem:[#allocation1] sm:$0xff pattern:$0x75316420]
      %v277 = vld.sshfl [vmem:[#allocation1 + $0x8] sm:$0xff pattern:$0x75316420]
      %vm279 = vcmask 523264
      %v280 = vsel %vm279, %v277, 0
      %282 = vmatpush.msra.mxu0 %v232
      %283 = vmatpush.msra.mxu0 %v228
      %284 = vmatpush.msra.mxu0 %v224
      %285 = vmatpush.msra.mxu0 %v220
      %286 = vmatpush.msra.mxu0 %v216
      %287 = vmatpush.msra.mxu0 %v212
      %288 = vmatpush.msra.mxu0 %v208
      %289 = vmatpush.msra.mxu0 %v204
      %290 = vmatpush.msra.mxu0 %v200
      %291 = vmatpush.msra.mxu0 %v196
      %292 = vmatpush.msra.mxu0 %v192
      %293 = vmatpush.msra.mxu0 %v188
      %294 = vmatpush.msra.mxu0 %v184
      %295 = vmatpush.msra.mxu0 %v180
      %296 = vmatpush.msra.mxu0 %v176
      %297 = vmatpush.msra.mxu0 %v172
      %298 = vmatmul.f32.gmra.mxu0 %v276
      %v299 = vpop.f32.mrf.mxu0
      %v300 = vadd.f32 %v272, %v299
      %301 = vdwg.mxu0
      %302 = vmatpush.msra.mxu0 0.0
      %303 = vmatpush.msra.mxu0 0.0
      %304 = vmatpush.msra.mxu0 0.0
      %305 = vmatpush.msra.mxu0 0.0
      %306 = vmatpush.msra.mxu0 0.0
      %307 = vmatpush.msra.mxu0 0.0
      %308 = vmatpush.msra.mxu0 0.0
      %309 = vmatpush.msra.mxu0 0.0
      %310 = vmatpush.msra.mxu0 %v264
      %311 = vmatpush.msra.mxu0 %v260
      %312 = vmatpush.msra.mxu0 %v256
      %313 = vmatpush.msra.mxu0 %v252
      %314 = vmatpush.msra.mxu0 %v248
      %315 = vmatpush.msra.mxu0 %v244
      %316 = vmatpush.msra.mxu0 %v240
      %317 = vmatpush.msra.mxu0 %v236
      %318 = vmatmul.f32.gmra.mxu0 %v280
      %v319 = vpop.f32.mrf.mxu0
      %v320 = vadd.f32 %v300, %v319
      %321 = vdwg.mxu0
      %322 = vmatpush.msra.mxu0 %v233
      %323 = vmatpush.msra.mxu0 %v229
      %324 = vmatpush.msra.mxu0 %v225
      %325 = vmatpush.msra.mxu0 %v221
      %326 = vmatpush.msra.mxu0 %v217
      %327 = vmatpush.msra.mxu0 %v213
      %328 = vmatpush.msra.mxu0 %v209
      %329 = vmatpush.msra.mxu0 %v205
      %330 = vmatpush.msra.mxu0 %v201
      %331 = vmatpush.msra.mxu0 %v197
      %332 = vmatpush.msra.mxu0 %v193
      %333 = vmatpush.msra.mxu0 %v189
      %334 = vmatpush.msra.mxu0 %v185
      %335 = vmatpush.msra.mxu0 %v181
      %336 = vmatpush.msra.mxu0 %v177
      %337 = vmatpush.msra.mxu0 %v173
      %338 = vmatmul.f32.gmra.mxu0 %v276
      %v339 = vpop.f32.mrf.mxu0
      %v340 = vadd.f32 %v272, %v339
      %341 = vdwg.mxu0
      %342 = vmatpush.msra.mxu0 0.0
      %343 = vmatpush.msra.mxu0 0.0
      %344 = vmatpush.msra.mxu0 0.0
      %345 = vmatpush.msra.mxu0 0.0
      %346 = vmatpush.msra.mxu0 0.0
      %347 = vmatpush.msra.mxu0 0.0
      %348 = vmatpush.msra.mxu0 0.0
      %349 = vmatpush.msra.mxu0 0.0
      %350 = vmatpush.msra.mxu0 %v265
      %351 = vmatpush.msra.mxu0 %v261
      %352 = vmatpush.msra.mxu0 %v257
      %353 = vmatpush.msra.mxu0 %v253
      %354 = vmatpush.msra.mxu0 %v249
      %355 = vmatpush.msra.mxu0 %v245
      %356 = vmatpush.msra.mxu0 %v241
      %357 = vmatpush.msra.mxu0 %v237
      %358 = vmatmul.f32.gmra.mxu0 %v280
      %v359 = vpop.f32.mrf.mxu0
      %v360 = vadd.f32 %v340, %v359
      %361 = vdwg.mxu0
      %362 = vmatpush.msra.mxu0 %v234
      %363 = vmatpush.msra.mxu0 %v230
      %364 = vmatpush.msra.mxu0 %v226
      %365 = vmatpush.msra.mxu0 %v222
      %366 = vmatpush.msra.mxu0 %v218
      %367 = vmatpush.msra.mxu0 %v214
      %368 = vmatpush.msra.mxu0 %v210
      %369 = vmatpush.msra.mxu0 %v206
      %370 = vmatpush.msra.mxu0 %v202
      %371 = vmatpush.msra.mxu0 %v198
      %372 = vmatpush.msra.mxu0 %v194
      %373 = vmatpush.msra.mxu0 %v190
      %374 = vmatpush.msra.mxu0 %v186
      %375 = vmatpush.msra.mxu0 %v182
      %376 = vmatpush.msra.mxu0 %v178
      %377 = vmatpush.msra.mxu0 %v174
      %378 = vmatmul.f32.gmra.mxu0 %v276
      %v379 = vpop.f32.mrf.mxu0
      %v380 = vadd.f32 %v272, %v379
      %381 = vdwg.mxu0
      %382 = vmatpush.msra.mxu0 0.0
      %383 = vmatpush.msra.mxu0 0.0
      %384 = vmatpush.msra.mxu0 0.0
      %385 = vmatpush.msra.mxu0 0.0
      %386 = vmatpush.msra.mxu0 0.0
      %387 = vmatpush.msra.mxu0 0.0
      %388 = vmatpush.msra.mxu0 0.0
      %389 = vmatpush.msra.mxu0 0.0
      %390 = vmatpush.msra.mxu0 %v266
      %391 = vmatpush.msra.mxu0 %v262
      %392 = vmatpush.msra.mxu0 %v258
      %393 = vmatpush.msra.mxu0 %v254
      %394 = vmatpush.msra.mxu0 %v250
      %395 = vmatpush.msra.mxu0 %v246
      %396 = vmatpush.msra.mxu0 %v242
      %397 = vmatpush.msra.mxu0 %v238
      %398 = vmatmul.f32.gmra.mxu0 %v280
      %v399 = vpop.f32.mrf.mxu0
      %v400 = vadd.f32 %v380, %v399
      %401 = vdwg.mxu0
      %402 = vmatpush.msra.mxu0 %v235
      %403 = vmatpush.msra.mxu0 %v231
      %404 = vmatpush.msra.mxu0 %v227
      %405 = vmatpush.msra.mxu0 %v223
      %406 = vmatpush.msra.mxu0 %v219
      %407 = vmatpush.msra.mxu0 %v215
      %408 = vmatpush.msra.mxu0 %v211
      %409 = vmatpush.msra.mxu0 %v207
      %410 = vmatpush.msra.mxu0 %v203
      %411 = vmatpush.msra.mxu0 %v199
      %412 = vmatpush.msra.mxu0 %v195
      %413 = vmatpush.msra.mxu0 %v191
      %414 = vmatpush.msra.mxu0 %v187
      %415 = vmatpush.msra.mxu0 %v183
      %416 = vmatpush.msra.mxu0 %v179
      %417 = vmatpush.msra.mxu0 %v175
      %418 = vmatmul.f32.gmra.mxu0 %v276
      %v419 = vpop.f32.mrf.mxu0
      %v420 = vadd.f32 %v272, %v419
      %421 = vdwg.mxu0
      %422 = vmatpush.msra.mxu0 0.0
      %423 = vmatpush.msra.mxu0 0.0
      %424 = vmatpush.msra.mxu0 0.0
      %425 = vmatpush.msra.mxu0 0.0
      %426 = vmatpush.msra.mxu0 0.0
      %427 = vmatpush.msra.mxu0 0.0
      %428 = vmatpush.msra.mxu0 0.0
      %429 = vmatpush.msra.mxu0 0.0
      %430 = vmatpush.msra.mxu0 %v267
      %431 = vmatpush.msra.mxu0 %v263
      %432 = vmatpush.msra.mxu0 %v259
      %433 = vmatpush.msra.mxu0 %v255
      %434 = vmatpush.msra.mxu0 %v251
      %435 = vmatpush.msra.mxu0 %v247
      %436 = vmatpush.msra.mxu0 %v243
      %437 = vmatpush.msra.mxu0 %v239
      %438 = vmatmul.f32.gmra.mxu0 %v280
      %v439 = vpop.f32.mrf.mxu0
      %v440 = vadd.f32 %v420, %v439
      %441 = vdwg.mxu0
      %v442 = vmax.f32 %v320, 0.0
      %v443 = vmax.f32 %v360, 0.0
      %v444 = vmax.f32 %v400, 0.0
      %v445 = vmax.f32 %v440, 0.0
      %v450 = vrot.slane %v443, 4
      %v451 = vrot.slane %v445, 4
      %vm452 = vcmask 1043456
      %v453 = vsel %vm452, %v442, %v450
      %v454 = vsel %vm452, %v444, %v451
      %457 = vst [vmem:[%s170] sm:$0xff] %v453
      %vm458 = vcmask 465924
      %vm459 = vmor %vm458, %vm452
      %460 = vst.msk [vmem:[%s170 + $0x8] sm:$0xff] %vm459, %v454
      %p461 = scmp.lt.s32.totalorder %s14, 1
      %s462 = scalar_select %p461, %s14, 1
      %s463 = smul.addr %s462, 4
      %s464 = smul.addr %s463, 4
      %s465 = scalar_lea.vmem %s3, %s464
      // Predicated region
      $region33: #{tencoder_forward.2} parent=31 // pred_check
        %p466 = pneg %p100
      $region34: #{tencoder_forward.2} parent=31 // pred_check_branch
        %468 = sbr.rel (%p466) target = $region36
      $region35: #{tencoder_forward.2} parent=31 // pred_region
        _
      $region36: #{tencoder_forward.2} parent=31 // pred_fallthru
        _
    $region32: #{tencoder_forward.2} parent=5 // pred_fallthru
      _
    %p469 = scmp.le.s32.totalorder 2, %s9
    // Predicated region
    $region37: #{tencoder_forward.2} parent=5 // pred_check
      %p470 = pneg %p469
    $region38: #{tencoder_forward.2} parent=5 // pred_check_branch
      %472 = sbr.rel (%p470) target = $region40
    $region39: #{tencoder_forward.2} parent=5 // pred_region
      %s473 = ssub.s32 %s9, 2
      // Predicated region
      $region41: #{tencoder_forward.2} parent=39 // pred_check
        %p474 = pneg %p106
      $region42: #{tencoder_forward.2} parent=39 // pred_check_branch
        %476 = sbr.rel (%p474) target = $region44
      $region43: #{tencoder_forward.2} parent=39 // pred_region
        %p477 = scmp.lt.s32.totalorder %s15, 1
        %s478 = scalar_select %p477, %s15, 1
        %s479 = smul.addr %s478, 4
        %s480 = smul.addr %s479, 4
        %s481 = scalar_lea.vmem %s3, %s480
      $region44: #{tencoder_forward.2} parent=39 // pred_fallthru
        _
    $region40: #{tencoder_forward.2} parent=5 // pred_fallthru
      _
  $region6: #{tencoder_forward.2} parent=0 // loop_footer
    %s13 = sadd.s32 1, %s9
  $region7: #{tencoder_forward.2} parent=0 // loop_footer_branch
    %8 = sbr.rel target = $region3
  $region8: #{tencoder_forward.2} parent=0 // loop_exit
    _

// kernel: tencoder_forward.3
$region0: #{tencoder_forward.3}
  #allocation0 [shape = 'u32[]', space=smem, size = 0x4, offset = 0x4, fixed_abs, tag = 'smem constant byte address 0x4 - core index']
  #allocation1 [shape = 'u32[72,128]{1,0:T(1,128)}', space=vmem, size = 0x9000, scoped, tag = 'internal scratch']
  %s0 = inlined_call_operand.vmem [shape: f32[2,64,121], index: 0, kind: input, shape index: {}]
  %s1 = inlined_call_operand.vmem [shape: f32[8,64], index: 1, kind: input, shape index: {}]
  %s2 = inlined_call_operand.vmem [shape: f32[8,1], index: 2, kind: input, shape index: {}]
  %s3 = inlined_call_operand.vmem [shape: f32[8,121,128], index: 3, kind: input, shape index: {}]
  %s4 = inlined_call_operand.vmem [shape: f32[1,128], index: 4, kind: input, shape index: {}]
  %s5 = inlined_call_operand.vmem [shape: f32[128,8], index: 5, kind: input, shape index: {}]
  %s6 = inlined_call_operand.vmem [shape: f32[1,8], index: 6, kind: input, shape index: {}]
  %s7 = inlined_call_operand.hbm [shape: f32[2,1,8], index: 7, kind: output, shape index: {}]
  %s8 = sld [smem:[#allocation0]]
  $region61: #{tencoder_forward.3} parent=0
    _
  %s10 = ssub.s32 1, %s8
  %s11 = scalar_select 0, %s10, %s8
  $region1: #{tencoder_forward.3} parent=0
    #allocation2 [shape = 'u8[1024]{0}', space=vmem, size = 0x400, scoped, tag = 'output window, operand 0']
    #allocation3 [shape = 's32[2]{0}', space=sflag, size = 0x8, scoped, tag = 'scoped memory for tencoder_forward.3']
    %12 = vsyncpa [#allocation3], 0
    %s13 = scalar_lea.sflag [#allocation3], 1
    %14 = vsyncpa %s13, 0
    loop: start=0, step=1, limit=4
    $region2: #{tencoder_forward.3} parent=1 // loop_pre_header
      _
    $region3: #{tencoder_forward.3} parent=1 // loop_header
      %s16 = sphi 0, %s20
      %p17 = scmp.ge.s32.totalorder %s16, 4
      %s26 = sphi 0, %s28
      %s29 = sphi 0, %s26
      %s30 = sphi 0, %s29
      %s46 = sphi 0, %s30
      %s50 = sphi 0, %s50
      %s52 = sphi 0, %s50
      %s53 = sphi 0, %s52
      %s67 = sphi 0, %s53
      %s71 = sphi 0, %s71
      %s73 = sphi 0, %s71
      %s74 = sphi 0, %s73
      %s88 = sphi 0, %s74
      %s92 = sphi 0, %s92
      %s94 = sphi 0, %s92
      %s95 = sphi 0, %s94
      %s109 = sphi 0, %s95
      %s113 = sphi 0, %s113
      %s115 = sphi 0, %s113
      %s116 = sphi 0, %s115
      %s130 = sphi 0, %s116
      %s134 = sphi 0, %s134
      %s136 = sphi 0, %s134
      %s137 = sphi 0, %s136
      %s151 = sphi 0, %s137
      %s155 = sphi 0, %s155
      %s157 = sphi 0, %s155
      %s158 = sphi 0, %s157
      %s172 = sphi 0, %s158
      %s178 = sphi 0, %s180
      %s181 = sphi 0, %s178
      %s182 = sphi 0, %s181
      %s198 = sphi 0, %s182
    $region4: #{tencoder_forward.3} parent=1 // loop_header_branch
      %19 = sbr.rel (%p17) target = $region8
    $region5: #{tencoder_forward.3} parent=1 // loop_body
      %s21 = ssub.s32 %s16, 1
      %s22 = ssub.s32 %s16, 2
      %s23 = sadd.s32 %s16, 1
      %s24 = ssub.s32 %s16, %s23
      %p25 = scmp.eq.s32.totalorder %s24, 0
      %s27 = sadd.s32 %s26, 1
      %s28 = scalar_select %p25, %s26, %s27
      %p31 = pneg %p25
      %p32 = scmp.eq.s32.totalorder %s16, 1
      %p33 = por %p31, %p32
      %p34 = scmp.ne.s32.totalorder %s26, %s29
      %p35 = scmp.eq.s32.totalorder %s16, 0
      %p36 = por %p34, %p35
      %p37 = scmp.ne.s32.totalorder %s26, %s29
      %p38 = scmp.eq.s32.totalorder %s21, 1
      %p39 = por %p37, %p38
      %p40 = scmp.ne.s32.totalorder %s29, %s30
      %p41 = scmp.eq.s32.totalorder %s21, 0
      %p42 = por %p40, %p41
      %p43 = scmp.ne.s32.totalorder %s29, %s30
      %p44 = scmp.eq.s32.totalorder %s22, 1
      %p45 = por %p43, %p44
      %p47 = scmp.ne.s32.totalorder %s30, %s46
      %p48 = scmp.eq.s32.totalorder %s22, 0
      %p49 = por %p47, %p48
      %s51 = sadd.s32 %s50, 1
      %p54 = scmp.eq.s32.totalorder %s16, 1
      %p55 = scmp.ne.s32.totalorder %s50, %s52
      %p56 = scmp.eq.s32.totalorder %s16, 0
      %p57 = por %p55, %p56
      %p58 = scmp.ne.s32.totalorder %s50, %s52
      %p59 = scmp.eq.s32.totalorder %s21, 1
      %p60 = por %p58, %p59
      %p61 = scmp.ne.s32.totalorder %s52, %s53
      %p62 = scmp.eq.s32.totalorder %s21, 0
      %p63 = por %p61, %p62
      %p64 = scmp.ne.s32.totalorder %s52, %s53
      %p65 = scmp.eq.s32.totalorder %s22, 1
      %p66 = por %p64, %p65
      %p68 = scmp.ne.s32.totalorder %s53, %s67
      %p69 = scmp.eq.s32.totalorder %s22, 0
      %p70 = por %p68, %p69
      %s72 = sadd.s32 %s71, 1
      %p75 = scmp.eq.s32.totalorder %s16, 1
      %p76 = scmp.ne.s32.totalorder %s71, %s73
      %p77 = scmp.eq.s32.totalorder %s16, 0
      %p78 = por %p76, %p77
      %p79 = scmp.ne.s32.totalorder %s71, %s73
      %p80 = scmp.eq.s32.totalorder %s21, 1
      %p81 = por %p79, %p80
      %p82 = scmp.ne.s32.totalorder %s73, %s74
      %p83 = scmp.eq.s32.totalorder %s21, 0
      %p84 = por %p82, %p83
      %p85 = scmp.ne.s32.totalorder %s73, %s74
      %p86 = scmp.eq.s32.totalorder %s22, 1
      %p87 = por %p85, %p86
      %p89 = scmp.ne.s32.totalorder %s74, %s88
      %p90 = scmp.eq.s32.totalorder %s22, 0
      %p91 = por %p89, %p90
      %s93 = sadd.s32 %s92, 1
      %p96 = scmp.eq.s32.totalorder %s16, 1
      %p97 = scmp.ne.s32.totalorder %s92, %s94
      %p98 = scmp.eq.s32.totalorder %s16, 0
      %p99 = por %p97, %p98
      %p100 = scmp.ne.s32.totalorder %s92, %s94
      %p101 = scmp.eq.s32.totalorder %s21, 1
      %p102 = por %p100, %p101
      %p103 = scmp.ne.s32.totalorder %s94, %s95
      %p104 = scmp.eq.s32.totalorder %s21, 0
      %p105 = por %p103, %p104
      %p106 = scmp.ne.s32.totalorder %s94, %s95
      %p107 = scmp.eq.s32.totalorder %s22, 1
      %p108 = por %p106, %p107
      %p110 = scmp.ne.s32.totalorder %s95, %s109
      %p111 = scmp.eq.s32.totalorder %s22, 0
      %p112 = por %p110, %p111
      %s114 = sadd.s32 %s113, 1
      %p117 = scmp.eq.s32.totalorder %s16, 1
      %p118 = scmp.ne.s32.totalorder %s113, %s115
      %p119 = scmp.eq.s32.totalorder %s16, 0
      %p120 = por %p118, %p119
      %p121 = scmp.ne.s32.totalorder %s113, %s115
      %p122 = scmp.eq.s32.totalorder %s21, 1
      %p123 = por %p121, %p122
      %p124 = scmp.ne.s32.totalorder %s115, %s116
      %p125 = scmp.eq.s32.totalorder %s21, 0
      %p126 = por %p124, %p125
      %p127 = scmp.ne.s32.totalorder %s115, %s116
      %p128 = scmp.eq.s32.totalorder %s22, 1
      %p129 = por %p127, %p128
      %p131 = scmp.ne.s32.totalorder %s116, %s130
      %p132 = scmp.eq.s32.totalorder %s22, 0
      %p133 = por %p131, %p132
      %s135 = sadd.s32 %s134, 1
      %p138 = scmp.eq.s32.totalorder %s16, 1
      %p139 = scmp.ne.s32.totalorder %s134, %s136
      %p140 = scmp.eq.s32.totalorder %s16, 0
      %p141 = por %p139, %p140
      %p142 = scmp.ne.s32.totalorder %s134, %s136
      %p143 = scmp.eq.s32.totalorder %s21, 1
      %p144 = por %p142, %p143
      %p145 = scmp.ne.s32.totalorder %s136, %s137
      %p146 = scmp.eq.s32.totalorder %s21, 0
      %p147 = por %p145, %p146
      %p148 = scmp.ne.s32.totalorder %s136, %s137
      %p149 = scmp.eq.s32.totalorder %s22, 1
      %p150 = por %p148, %p149
      %p152 = scmp.ne.s32.totalorder %s137, %s151
      %p153 = scmp.eq.s32.totalorder %s22, 0
      %p154 = por %p152, %p153
      %s156 = sadd.s32 %s155, 1
      %p159 = scmp.eq.s32.totalorder %s16, 1
      %p160 = scmp.ne.s32.totalorder %s155, %s157
      %p161 = scmp.eq.s32.totalorder %s16, 0
      %p162 = por %p160, %p161
      %p163 = scmp.ne.s32.totalorder %s155, %s157
      %p164 = scmp.eq.s32.totalorder %s21, 1
      %p165 = por %p163, %p164
      %p166 = scmp.ne.s32.totalorder %s157, %s158
      %p167 = scmp.eq.s32.totalorder %s21, 0
      %p168 = por %p166, %p167
      %p169 = scmp.ne.s32.totalorder %s157, %s158
      %p170 = scmp.eq.s32.totalorder %s22, 1
      %p171 = por %p169, %p170
      %p173 = scmp.ne.s32.totalorder %s158, %s172
      %p174 = scmp.eq.s32.totalorder %s22, 0
      %p175 = por %p173, %p174
      %s176 = ssub.s32 %s16, %s23
      %p177 = scmp.eq.s32.totalorder %s176, 0
      %s179 = sadd.s32 %s178, 1
      %s180 = scalar_select %p177, %s178, %s179
      %p183 = pneg %p177
      %p184 = scmp.eq.s32.totalorder %s16, 1
      %p185 = por %p183, %p184
      %p186 = scmp.ne.s32.totalorder %s178, %s181
      %p187 = scmp.eq.s32.totalorder %s16, 0
      %p188 = por %p186, %p187
      %p189 = scmp.ne.s32.totalorder %s178, %s181
      %p190 = scmp.eq.s32.totalorder %s21, 1
      %p191 = por %p189, %p190
      %p192 = scmp.ne.s32.totalorder %s181, %s182
      %p193 = scmp.eq.s32.totalorder %s21, 0
      %p194 = por %p192, %p193
      %p195 = scmp.ne.s32.totalorder %s181, %s182
      %p196 = scmp.eq.s32.totalorder %s22, 1
      %p197 = por %p195, %p196
      %p199 = scmp.ne.s32.totalorder %s182, %s198
      %p200 = scmp.eq.s32.totalorder %s22, 0
      %p201 = por %p199, %p200
      %p202 = scmp.le.s32.totalorder 1, %s16
      %p203 = scmp.lt.s32.totalorder %s16, 3
      %p204 = pnand %p202, %p203
      %p205 = pneg %p204
      // Predicated region
      $region9: #{tencoder_forward.3} parent=5 // pred_check
        _
      $region10: #{tencoder_forward.3} parent=5 // pred_check_branch
        %207 = sbr.rel (%p204) target = $region12
      $region11: #{tencoder_forward.3} parent=5 // pred_region
        %s208 = ssub.s32 %s16, 1
        // Predicated region
        $region13: #{tencoder_forward.3} parent=11 // pred_check
          %p209 = pneg %p63
        $region14: #{tencoder_forward.3} parent=11 // pred_check_branch
          %211 = sbr.rel (%p209) target = $region16
        $region15: #{tencoder_forward.3} parent=11 // pred_region
          _
        $region16: #{tencoder_forward.3} parent=11 // pred_fallthru
          _
        // Predicated region
        $region17: #{tencoder_forward.3} parent=11 // pred_check
          %p212 = pneg %p84
        $region18: #{tencoder_forward.3} parent=11 // pred_check_branch
          %214 = sbr.rel (%p212) target = $region20
        $region19: #{tencoder_forward.3} parent=11 // pred_region
          _
        $region20: #{tencoder_forward.3} parent=11 // pred_fallthru
          _
        // Predicated region
        $region21: #{tencoder_forward.3} parent=11 // pred_check
          %p215 = pneg %p105
        $region22: #{tencoder_forward.3} parent=11 // pred_check_branch
          %217 = sbr.rel (%p215) target = $region24
        $region23: #{tencoder_forward.3} parent=11 // pred_region
          _
        $region24: #{tencoder_forward.3} parent=11 // pred_fallthru
          _
        // Predicated region
        $region25: #{tencoder_forward.3} parent=11 // pred_check
          %p218 = pneg %p126
        $region26: #{tencoder_forward.3} parent=11 // pred_check_branch
          %220 = sbr.rel (%p218) target = $region28
        $region27: #{tencoder_forward.3} parent=11 // pred_region
          _
        $region28: #{tencoder_forward.3} parent=11 // pred_fallthru
          _
        // Predicated region
        $region29: #{tencoder_forward.3} parent=11 // pred_check
          %p221 = pneg %p147
        $region30: #{tencoder_forward.3} parent=11 // pred_check_branch
          %223 = sbr.rel (%p221) target = $region32
        $region31: #{tencoder_forward.3} parent=11 // pred_region
          _
        $region32: #{tencoder_forward.3} parent=11 // pred_fallthru
          _
        // Predicated region
        $region33: #{tencoder_forward.3} parent=11 // pred_check
          %p224 = pneg %p168
        $region34: #{tencoder_forward.3} parent=11 // pred_check_branch
          %226 = sbr.rel (%p224) target = $region36
        $region35: #{tencoder_forward.3} parent=11 // pred_region
          _
        $region36: #{tencoder_forward.3} parent=11 // pred_fallthru
          _
      $region12: #{tencoder_forward.3} parent=5 // pred_fallthru
        _
      %p227 = scmp.lt.s32.totalorder %s16, 2
      // Predicated region
      $region37: #{tencoder_forward.3} parent=5 // pred_check
        %p228 = pneg %p227
      $region38: #{tencoder_forward.3} parent=5 // pred_check_branch
        %230 = sbr.rel (%p228) target = $region40
      $region39: #{tencoder_forward.3} parent=5 // pred_region
        // Predicated region
        $region41: #{tencoder_forward.3} parent=39 // pred_check
          %p231 = pneg %p36
        $region42: #{tencoder_forward.3} parent=39 // pred_check_branch
          %233 = sbr.rel (%p231) target = $region44
        $region43: #{tencoder_forward.3} parent=39 // pred_region
          %p234 = scmp.lt.s32.totalorder %s16, 1
          %s235 = scalar_select %p234, %s16, 1
          %s236 = smul.addr %s235, 8
          %s237 = smul.addr %s236, 8
          %s238 = scalar_lea.vmem %s0, %s237
        $region44: #{tencoder_forward.3} parent=39 // pred_fallthru
          _
      $region40: #{tencoder_forward.3} parent=5 // pred_fallthru
        _
      %p239 = scmp.le.s32.totalorder 1, %s16
      %p240 = scmp.lt.s32.totalorder %s16, 3
      %p241 = pnand %p239, %p240
      %p242 = pneg %p241
      // Predicated region
      $region45: #{tencoder_forward.3} parent=5 // pred_check
        _
      $region46: #{tencoder_forward.3} parent=5 // pred_check_branch
        %244 = sbr.rel (%p241) target = $region48
      $region47: #{tencoder_forward.3} parent=5 // pred_region
        %s245 = ssub.s32 %s16, 1
        %p246 = scmp.lt.s32.totalorder %s21, 1
        %s247 = scalar_select %p246, %s21, 1
        %s248 = smul.addr %s247, 8
        %s249 = smul.addr %s248, 8
        %s250 = scalar_lea.vmem %s0, %s249
        %p251 = pneg %p42
        %p252 = pneg %p39
        %p253 = pneg %p63
        %p254 = pneg %p60
        %p255 = pneg %p84
        %p256 = pneg %p81
        %p257 = pneg %p105
        %p258 = pneg %p102
        %p259 = pneg %p126
        %p260 = pneg %p123
        %p261 = pneg %p147
        %p262 = pneg %p144
        %p263 = pneg %p168
        %p264 = pneg %p165
        %p265 = pneg %p194
        %p266 = pneg %p191
        %s267 = sand.u32 %s181, 1
        %s268 = scalar_lea.sflag [#allocation3], %s267
        %s269 = sand.u32 %s181, 1
        %s270 = scalar_lea.vmem [#allocation2], %s269
        %p271 = scmp.lt.s32.totalorder %s21, 1
        %s272 = scalar_select %p271, %s21, 1
        %s273 = smul.addr %s272, 8
        %s274 = smul.addr %s273, 8
        %s275 = scalar_lea.vmem %s0, %s274
        %v276 = vld [vmem:[%s275] sm:$0xff]
        %v277 = vld [vmem:[%s275 + $0x8] sm:$0xff]
        %v278 = vld [vmem:[%s275 + $0x10] sm:$0xff]
        %v279 = vld [vmem:[%s275 + $0x18] sm:$0xff]
        %v280 = vld [vmem:[%s275 + $0x20] sm:$0xff]
        %v281 = vld [vmem:[%s275 + $0x28] sm:$0xff]
        %v282 = vld [vmem:[%s275 + $0x30] sm:$0xff]
        %v283 = vld [vmem:[%s275 + $0x38] sm:$0xff]
        %v284 = vld [vmem:[%s1] sm:$0xff]
        %v285 = vld [vmem:[%s2] sm:$0xff]
        %287 = vset.pattern.permute.xlu0 0
        %288 = vperm.xlu0 %287, %v285
        %v289 = vpop.permute.xlu0 %288
        %vm291 = vcmask 523264
        %v293 = vsel %vm291, %v284, 0
        %295 = vmatpush.msra.mxu0 0.0
        %296 = vmatpush.msra.mxu0 0.0
        %297 = vmatpush.msra.mxu0 0.0
        %298 = vmatpush.msra.mxu0 0.0
        %299 = vmatpush.msra.mxu0 0.0
        %300 = vmatpush.msra.mxu0 0.0
        %301 = vmatpush.msra.mxu0 0.0
        %302 = vmatpush.msra.mxu0 0.0
        %303 = vmatpush.msra.mxu0 %v283
        %304 = vmatpush.msra.mxu0 %v282
        %305 = vmatpush.msra.mxu0 %v281
        %306 = vmatpush.msra.mxu0 %v280
        %307 = vmatpush.msra.mxu0 %v279
        %308 = vmatpush.msra.mxu0 %v278
        %309 = vmatpush.msra.mxu0 %v277
        %310 = vmatpush.msra.mxu0 %v276
        %311 = vmatmul.f32.gmra.mxu0 %v293
        %v312 = vpop.f32.mrf.mxu0
        %v313 = vadd.f32 %v289, %v312
        %314 = vdwg.mxu0
        %v315 = vmax.f32 %v313, 0.0
        %v316 = vld [vmem:[%s4] sm:$0x1]
        %v317 = vld [vmem:[%s3] sm:$0xff]
        %v318 = vld [vmem:[%s3 + $0x8] sm:$0xff]
        %v319 = vld [vmem:[%s3 + $0x10] sm:$0xff]
        %v320 = vld [vmem:[%s3 + $0x18] sm:$0xff]
        %v321 = vld [vmem:[%s3 + $0x20] sm:$0xff]
        %v322 = vld [vmem:[%s3 + $0x28] sm:$0xff]
        %v323 = vld [vmem:[%s3 + $0x30] sm:$0xff]
        %v324 = vld [vmem:[%s3 + $0x38] sm:$0xff]
        %v325 = vld [vmem:[%s3 + $0x40] sm:$0xff]
        %v326 = vld [vmem:[%s3 + $0x48] sm:$0xff]
        %v327 = vld [vmem:[%s3 + $0x50] sm:$0xff]
        %v328 = vld [vmem:[%s3 + $0x58] sm:$0xff]
        %v329 = vld [vmem:[%s3 + $0x60] sm:$0xff]
        %v330 = vld [vmem:[%s3 + $0x68] sm:$0xff]
        %v331 = vld [vmem:[%s3 + $0x70] sm:$0xff]
        %v332 = vld [vmem:[%s3 + $0x78] sm:$0x1]
        %vm333 = vcmask 990208
        %v335 = vsel %vm333, %v315, 0
        %vm337 = vcmask 1040384
        %v339 = vsel %vm337, %v332, 0
        %341 = vmatpush.msra.mxu0 %v339
        %342 = vmatpush.msra.mxu0 %v331
        %343 = vmatpush.msra.mxu0 %v330
        %344 = vmatpush.msra.mxu0 %v329
        %345 = vmatpush.msra.mxu0 %v328
        %346 = vmatpush.msra.mxu0 %v327
        %347 = vmatpush.msra.mxu0 %v326
        %348 = vmatpush.msra.mxu0 %v325
        %349 = vmatpush.msra.mxu0 %v324
        %350 = vmatpush.msra.mxu0 %v323
        %351 = vmatpush.msra.mxu0 %v322
        %352 = vmatpush.msra.mxu0 %v321
        %353 = vmatpush.msra.mxu0 %v320
        %354 = vmatpush.msra.mxu0 %v319
        %355 = vmatpush.msra.mxu0 %v318
        %356 = vmatpush.msra.mxu0 %v317
        %357 = vmatmul.f32.gmra.mxu0 %v335
        %v358 = vpop.f32.mrf.mxu0
        %v359 = vadd.f32 0.0, %v358
        %360 = vdwg.mxu0
        %v361 = vadd.f32 %v316, %v359
        %s362 = scalar_lea.vmem %s3, 128
        %v363 = vld [vmem:[%s362] sm:$0xff]
        %v364 = vld [vmem:[%s362 + $0x8] sm:$0xff]
        %v365 = vld [vmem:[%s362 + $0x10] sm:$0xff]
        %v366 = vld [vmem:[%s362 + $0x18] sm:$0xff]
        %v367 = vld [vmem:[%s362 + $0x20] sm:$0xff]
        %v368 = vld [vmem:[%s362 + $0x28] sm:$0xff]
        %v369 = vld [vmem:[%s362 + $0x30] sm:$0xff]
        %v370 = vld [vmem:[%s362 + $0x38] sm:$0xff]
        %v371 = vld [vmem:[%s362 + $0x40] sm:$0xff]
        %v372 = vld [vmem:[%s362 + $0x48] sm:$0xff]
        %v373 = vld [vmem:[%s362 + $0x50] sm:$0xff]
        %v374 = vld [vmem:[%s362 + $0x58] sm:$0xff]
        %v375 = vld [vmem:[%s362 + $0x60] sm:$0xff]
        %v376 = vld [vmem:[%s362 + $0x68] sm:$0xff]
        %v377 = vld [vmem:[%s362 + $0x70] sm:$0xff]
        %v378 = vld [vmem:[%s362 + $0x78] sm:$0x1]
        %v379 = vrot.slane %v315, 1
        %v380 = vsel %vm333, %v379, 0
        %v383 = vsel %vm337, %v378, 0
        %385 = vmatpush.msra.mxu0 %v383
        %386 = vmatpush.msra.mxu0 %v377
        %387 = vmatpush.msra.mxu0 %v376
        %388 = vmatpush.msra.mxu0 %v375
        %389 = vmatpush.msra.mxu0 %v374
        %390 = vmatpush.msra.mxu0 %v373
        %391 = vmatpush.msra.mxu0 %v372
        %392 = vmatpush.msra.mxu0 %v371
        %393 = vmatpush.msra.mxu0 %v370
        %394 = vmatpush.msra.mxu0 %v369
        %395 = vmatpush.msra.mxu0 %v368
        %396 = vmatpush.msra.mxu0 %v367
        %397 = vmatpush.msra.mxu0 %v366
        %398 = vmatpush.msra.mxu0 %v365
        %399 = vmatpush.msra.mxu0 %v364
        %400 = vmatpush.msra.mxu0 %v363
        %401 = vmatmul.f32.gmra.mxu0 %v380
        %v402 = vpop.f32.mrf.mxu0
        %v403 = vadd.f32 0.0, %v402
        %404 = vdwg.mxu0
        %v405 = vadd.f32 %v361, %v403
        %s406 = scalar_lea.vmem %s3, 256
        %v407 = vld [vmem:[%s406] sm:$0xff]
        %v408 = vld [vmem:[%s406 + $0x8] sm:$0xff]
        %v409 = vld [vmem:[%s406 + $0x10] sm:$0xff]
        %v410 = vld [vmem:[%s406 + $0x18] sm:$0xff]
        %v411 = vld [vmem:[%s406 + $0x20] sm:$0xff]
        %v412 = vld [vmem:[%s406 + $0x28] sm:$0xff]
        %v413 = vld [vmem:[%s406 + $0x30] sm:$0xff]
        %v414 = vld [vmem:[%s406 + $0x38] sm:$0xff]
        %v415 = vld [vmem:[%s406 + $0x40] sm:$0xff]
        %v416 = vld [vmem:[%s406 + $0x48] sm:$0xff]
        %v417 = vld [vmem:[%s406 + $0x50] sm:$0xff]
        %v418 = vld [vmem:[%s406 + $0x58] sm:$0xff]
        %v419 = vld [vmem:[%s406 + $0x60] sm:$0xff]
        %v420 = vld [vmem:[%s406 + $0x68] sm:$0xff]
        %v421 = vld [vmem:[%s406 + $0x70] sm:$0xff]
        %v422 = vld [vmem:[%s406 + $0x78] sm:$0x1]
        %v423 = vrot.slane %v315, 2
        %v424 = vsel %vm333, %v423, 0
        %v427 = vsel %vm337, %v422, 0
        %429 = vmatpush.msra.mxu0 %v427
        %430 = vmatpush.msra.mxu0 %v421
        %431 = vmatpush.msra.mxu0 %v420
        %432 = vmatpush.msra.mxu0 %v419
        %433 = vmatpush.msra.mxu0 %v418
        %434 = vmatpush.msra.mxu0 %v417
        %435 = vmatpush.msra.mxu0 %v416
        %436 = vmatpush.msra.mxu0 %v415
        %437 = vmatpush.msra.mxu0 %v414
        %438 = vmatpush.msra.mxu0 %v413
        %439 = vmatpush.msra.mxu0 %v412
        %440 = vmatpush.msra.mxu0 %v411
        %441 = vmatpush.msra.mxu0 %v410
        %442 = vmatpush.msra.mxu0 %v409
        %443 = vmatpush.msra.mxu0 %v408
        %444 = vmatpush.msra.mxu0 %v407
        %445 = vmatmul.f32.gmra.mxu0 %v424
        %v446 = vpop.f32.mrf.mxu0
        %v447 = vadd.f32 0.0, %v446
        %448 = vdwg.mxu0
        %v449 = vadd.f32 %v405, %v447
        %s450 = scalar_lea.vmem %s3, 384
        %v451 = vld [vmem:[%s450] sm:$0xff]
        %v452 = vld [vmem:[%s450 + $0x8] sm:$0xff]
        %v453 = vld [vmem:[%s450 + $0x10] sm:$0xff]
        %v454 = vld [vmem:[%s450 + $0x18] sm:$0xff]
        %v455 = vld [vmem:[%s450 + $0x20] sm:$0xff]
        %v456 = vld [vmem:[%s450 + $0x28] sm:$0xff]
        %v457 = vld [vmem:[%s450 + $0x30] sm:$0xff]
        %v458 = vld [vmem:[%s450 + $0x38] sm:$0xff]
        %v459 = vld [vmem:[%s450 + $0x40] sm:$0xff]
        %v460 = vld [vmem:[%s450 + $0x48] sm:$0xff]
        %v461 = vld [vmem:[%s450 + $0x50] sm:$0xff]
        %v462 = vld [vmem:[%s450 + $0x58] sm:$0xff]
        %v463 = vld [vmem:[%s450 + $0x60] sm:$0xff]
        %v464 = vld [vmem:[%s450 + $0x68] sm:$0xff]
        %v465 = vld [vmem:[%s450 + $0x70] sm:$0xff]
        %v466 = vld [vmem:[%s450 + $0x78] sm:$0x1]
        %v467 = vrot.slane %v315, 3
        %v468 = vsel %vm333, %v467, 0
        %v471 = vsel %vm337, %v466, 0
        %473 = vmatpush.msra.mxu0 %v471
        %474 = vmatpush.msra.mxu0 %v465
        %475 = vmatpush.msra.mxu0 %v464
        %476 = vmatpush.msra.mxu0 %v463
        %477 = vmatpush.msra.mxu0 %v462
        %478 = vmatpush.msra.mxu0 %v461
        %479 = vmatpush.msra.mxu0 %v460
        %480 = vmatpush.msra.mxu0 %v459
        %481 = vmatpush.msra.mxu0 %v458
        %482 = vmatpush.msra.mxu0 %v457
        %483 = vmatpush.msra.mxu0 %v456
        %484 = vmatpush.msra.mxu0 %v455
        %485 = vmatpush.msra.mxu0 %v454
        %486 = vmatpush.msra.mxu0 %v453
        %487 = vmatpush.msra.mxu0 %v452
        %488 = vmatpush.msra.mxu0 %v451
        %489 = vmatmul.f32.gmra.mxu0 %v468
        %v490 = vpop.f32.mrf.mxu0
        %v491 = vadd.f32 0.0, %v490
        %492 = vdwg.mxu0
        %v493 = vadd.f32 %v449, %v491
        %s494 = scalar_lea.vmem %s3, 512
        %v495 = vld [vmem:[%s494] sm:$0xff]
        %v496 = vld [vmem:[%s494 + $0x8] sm:$0xff]
        %v497 = vld [vmem:[%s494 + $0x10] sm:$0xff]
        %v498 = vld [vmem:[%s494 + $0x18] sm:$0xff]
        %v499 = vld [vmem:[%s494 + $0x20] sm:$0xff]
        %v500 = vld [vmem:[%s494 + $0x28] sm:$0xff]
        %v501 = vld [vmem:[%s494 + $0x30] sm:$0xff]
        %v502 = vld [vmem:[%s494 + $0x38] sm:$0xff]
        %v503 = vld [vmem:[%s494 + $0x40] sm:$0xff]
        %v504 = vld [vmem:[%s494 + $0x48] sm:$0xff]
        %v505 = vld [vmem:[%s494 + $0x50] sm:$0xff]
        %v506 = vld [vmem:[%s494 + $0x58] sm:$0xff]
        %v507 = vld [vmem:[%s494 + $0x60] sm:$0xff]
        %v508 = vld [vmem:[%s494 + $0x68] sm:$0xff]
        %v509 = vld [vmem:[%s494 + $0x70] sm:$0xff]
        %v510 = vld [vmem:[%s494 + $0x78] sm:$0x1]
        %v511 = vrot.slane %v315, 4
        %v512 = vsel %vm333, %v511, 0
        %v515 = vsel %vm337, %v510, 0
        %517 = vmatpush.msra.mxu0 %v515
        %518 = vmatpush.msra.mxu0 %v509
        %519 = vmatpush.msra.mxu0 %v508
        %520 = vmatpush.msra.mxu0 %v507
        %521 = vmatpush.msra.mxu0 %v506
        %522 = vmatpush.msra.mxu0 %v505
        %523 = vmatpush.msra.mxu0 %v504
        %524 = vmatpush.msra.mxu0 %v503
        %525 = vmatpush.msra.mxu0 %v502
        %526 = vmatpush.msra.mxu0 %v501
        %527 = vmatpush.msra.mxu0 %v500
        %528 = vmatpush.msra.mxu0 %v499
        %529 = vmatpush.msra.mxu0 %v498
        %530 = vmatpush.msra.mxu0 %v497
        %531 = vmatpush.msra.mxu0 %v496
        %532 = vmatpush.msra.mxu0 %v495
        %533 = vmatmul.f32.gmra.mxu0 %v512
        %v534 = vpop.f32.mrf.mxu0
        %v535 = vadd.f32 0.0, %v534
        %536 = vdwg.mxu0
        %v537 = vadd.f32 %v493, %v535
        %s538 = scalar_lea.vmem %s3, 640
        %v539 = vld [vmem:[%s538] sm:$0xff]
        %v540 = vld [vmem:[%s538 + $0x8] sm:$0xff]
        %v541 = vld [vmem:[%s538 + $0x10] sm:$0xff]
        %v542 = vld [vmem:[%s538 + $0x18] sm:$0xff]
        %v543 = vld [vmem:[%s538 + $0x20] sm:$0xff]
        %v544 = vld [vmem:[%s538 + $0x28] sm:$0xff]
        %v545 = vld [vmem:[%s538 + $0x30] sm:$0xff]
        %v546 = vld [vmem:[%s538 + $0x38] sm:$0xff]
        %v547 = vld [vmem:[%s538 + $0x40] sm:$0xff]
        %v548 = vld [vmem:[%s538 + $0x48] sm:$0xff]
        %v549 = vld [vmem:[%s538 + $0x50] sm:$0xff]
        %v550 = vld [vmem:[%s538 + $0x58] sm:$0xff]
        %v551 = vld [vmem:[%s538 + $0x60] sm:$0xff]
        %v552 = vld [vmem:[%s538 + $0x68] sm:$0xff]
        %v553 = vld [vmem:[%s538 + $0x70] sm:$0xff]
        %v554 = vld [vmem:[%s538 + $0x78] sm:$0x1]
        %v555 = vrot.slane %v315, 5
        %v556 = vsel %vm333, %v555, 0
        %v559 = vsel %vm337, %v554, 0
        %561 = vmatpush.msra.mxu0 %v559
        %562 = vmatpush.msra.mxu0 %v553
        %563 = vmatpush.msra.mxu0 %v552
        %564 = vmatpush.msra.mxu0 %v551
        %565 = vmatpush.msra.mxu0 %v550
        %566 = vmatpush.msra.mxu0 %v549
        %567 = vmatpush.msra.mxu0 %v548
        %568 = vmatpush.msra.mxu0 %v547
        %569 = vmatpush.msra.mxu0 %v546
        %570 = vmatpush.msra.mxu0 %v545
        %571 = vmatpush.msra.mxu0 %v544
        %572 = vmatpush.msra.mxu0 %v543
        %573 = vmatpush.msra.mxu0 %v542
        %574 = vmatpush.msra.mxu0 %v541
        %575 = vmatpush.msra.mxu0 %v540
        %576 = vmatpush.msra.mxu0 %v539
        %577 = vmatmul.f32.gmra.mxu0 %v556
        %v578 = vpop.f32.mrf.mxu0
        %v579 = vadd.f32 0.0, %v578
        %580 = vdwg.mxu0
        %v581 = vadd.f32 %v537, %v579
        %s582 = scalar_lea.vmem %s3, 768
        %v583 = vld [vmem:[%s582] sm:$0xff]
        %v584 = vld [vmem:[%s582 + $0x8] sm:$0xff]
        %v585 = vld [vmem:[%s582 + $0x10] sm:$0xff]
        %v586 = vld [vmem:[%s582 + $0x18] sm:$0xff]
        %v587 = vld [vmem:[%s582 + $0x20] sm:$0xff]
        %v588 = vld [vmem:[%s582 + $0x28] sm:$0xff]
        %v589 = vld [vmem:[%s582 + $0x30] sm:$0xff]
        %v590 = vld [vmem:[%s582 + $0x38] sm:$0xff]
        %v591 = vld [vmem:[%s582 + $0x40] sm:$0xff]
        %v592 = vld [vmem:[%s582 + $0x48] sm:$0xff]
        %v593 = vld [vmem:[%s582 + $0x50] sm:$0xff]
        %v594 = vld [vmem:[%s582 + $0x58] sm:$0xff]
        %v595 = vld [vmem:[%s582 + $0x60] sm:$0xff]
        %v596 = vld [vmem:[%s582 + $0x68] sm:$0xff]
        %v597 = vld [vmem:[%s582 + $0x70] sm:$0xff]
        %v598 = vld [vmem:[%s582 + $0x78] sm:$0x1]
        %v599 = vrot.slane %v315, 6
        %v600 = vsel %vm333, %v599, 0
        %v603 = vsel %vm337, %v598, 0
        %605 = vmatpush.msra.mxu0 %v603
        %606 = vmatpush.msra.mxu0 %v597
        %607 = vmatpush.msra.mxu0 %v596
        %608 = vmatpush.msra.mxu0 %v595
        %609 = vmatpush.msra.mxu0 %v594
        %610 = vmatpush.msra.mxu0 %v593
        %611 = vmatpush.msra.mxu0 %v592
        %612 = vmatpush.msra.mxu0 %v591
        %613 = vmatpush.msra.mxu0 %v590
        %614 = vmatpush.msra.mxu0 %v589
        %615 = vmatpush.msra.mxu0 %v588
        %616 = vmatpush.msra.mxu0 %v587
        %617 = vmatpush.msra.mxu0 %v586
        %618 = vmatpush.msra.mxu0 %v585
        %619 = vmatpush.msra.mxu0 %v584
        %620 = vmatpush.msra.mxu0 %v583
        %621 = vmatmul.f32.gmra.mxu0 %v600
        %v622 = vpop.f32.mrf.mxu0
        %v623 = vadd.f32 0.0, %v622
        %624 = vdwg.mxu0
        %v625 = vadd.f32 %v581, %v623
        %s626 = scalar_lea.vmem %s3, 896
        %v627 = vld [vmem:[%s626] sm:$0xff]
        %v628 = vld [vmem:[%s626 + $0x8] sm:$0xff]
        %v629 = vld [vmem:[%s626 + $0x10] sm:$0xff]
        %v630 = vld [vmem:[%s626 + $0x18] sm:$0xff]
        %v631 = vld [vmem:[%s626 + $0x20] sm:$0xff]
        %v632 = vld [vmem:[%s626 + $0x28] sm:$0xff]
        %v633 = vld [vmem:[%s626 + $0x30] sm:$0xff]
        %v634 = vld [vmem:[%s626 + $0x38] sm:$0xff]
        %v635 = vld [vmem:[%s626 + $0x40] sm:$0xff]
        %v636 = vld [vmem:[%s626 + $0x48] sm:$0xff]
        %v637 = vld [vmem:[%s626 + $0x50] sm:$0xff]
        %v638 = vld [vmem:[%s626 + $0x58] sm:$0xff]
        %v639 = vld [vmem:[%s626 + $0x60] sm:$0xff]
        %v640 = vld [vmem:[%s626 + $0x68] sm:$0xff]
        %v641 = vld [vmem:[%s626 + $0x70] sm:$0xff]
        %v642 = vld [vmem:[%s626 + $0x78] sm:$0x1]
        %v643 = vrot.slane %v315, 7
        %v644 = vsel %vm333, %v643, 0
        %v647 = vsel %vm337, %v642, 0
        %649 = vmatpush.msra.mxu0 %v647
        %650 = vmatpush.msra.mxu0 %v641
        %651 = vmatpush.msra.mxu0 %v640
        %652 = vmatpush.msra.mxu0 %v639
        %653 = vmatpush.msra.mxu0 %v638
        %654 = vmatpush.msra.mxu0 %v637
        %655 = vmatpush.msra.mxu0 %v636
        %656 = vmatpush.msra.mxu0 %v635
        %657 = vmatpush.msra.mxu0 %v634
        %658 = vmatpush.msra.mxu0 %v633
        %659 = vmatpush.msra.mxu0 %v632
        %660 = vmatpush.msra.mxu0 %v631
        %661 = vmatpush.msra.mxu0 %v630
        %662 = vmatpush.msra.mxu0 %v629
        %663 = vmatpush.msra.mxu0 %v628
        %664 = vmatpush.msra.mxu0 %v627
        %665 = vmatmul.f32.gmra.mxu0 %v644
        %v666 = vpop.f32.mrf.mxu0
        %v667 = vadd.f32 0.0, %v666
        %668 = vdwg.mxu0
        %v669 = vadd.f32 %v625, %v667
        %v670 = vmax.f32 %v669, 0.0
        %v671 = vld [vmem:[%s5] sm:$0xff]
        %v672 = vld [vmem:[%s5 + $0x8] sm:$0xff]
        %v673 = vld [vmem:[%s5 + $0x10] sm:$0xff]
        %v674 = vld [vmem:[%s5 + $0x18] sm:$0xff]
        %v675 = vld [vmem:[%s5 + $0x20] sm:$0xff]
        %v676 = vld [vmem:[%s5 + $0x28] sm:$0xff]
        %v677 = vld [vmem:[%s5 + $0x30] sm:$0xff]
        %v678 = vld [vmem:[%s5 + $0x38] sm:$0xff]
        %v679 = vld [vmem:[%s5 + $0x40] sm:$0xff]
        %v680 = vld [vmem:[%s5 + $0x48] sm:$0xff]
        %v681 = vld [vmem:[%s5 + $0x50] sm:$0xff]
        %v682 = vld [vmem:[%s5 + $0x58] sm:$0xff]
        %v683 = vld [vmem:[%s5 + $0x60] sm:$0xff]
        %v684 = vld [vmem:[%s5 + $0x68] sm:$0xff]
        %v685 = vld [vmem:[%s5 + $0x70] sm:$0xff]
        %v686 = vld [vmem:[%s5 + $0x78] sm:$0xff]
        %v687 = vld [vmem:[%s6] sm:$0x1]
        %688 = vmatpush.msra.mxu0 %v686
        %689 = vmatpush.msra.mxu0 %v685
        %690 = vmatpush.msra.mxu0 %v684
        %691 = vmatpush.msra.mxu0 %v683
        %692 = vmatpush.msra.mxu0 %v682
        %693 = vmatpush.msra.mxu0 %v681
        %694 = vmatpush.msra.mxu0 %v680
        %695 = vmatpush.msra.mxu0 %v679
        %696 = vmatpush.msra.mxu0 %v678
        %697 = vmatpush.msra.mxu0 %v677
        %698 = vmatpush.msra.mxu0 %v676
        %699 = vmatpush.msra.mxu0 %v675
        %700 = vmatpush.msra.mxu0 %v674
        %701 = vmatpush.msra.mxu0 %v673
        %702 = vmatpush.msra.mxu0 %v672
        %703 = vmatpush.msra.mxu0 %v671
        %704 = vmatmul.f32.gmra.mxu0 %v670
        %v705 = vpop.f32.mrf.mxu0
        %v706 = vadd.f32 %v687, %v705
        %707 = vdwg.mxu0
        %vm708 = vcmask 57344
        %709 = vst.msk [vmem:[%s270] sm:$0x1] %vm708, %v706
        %s710 = sand.u32 %s181, 1
        %s711 = scalar_lea.sflag [#allocation3], %s710
        %s712 = sand.u32 %s181, 1
        %s713 = scalar_lea.vmem [#allocation2], %s712
        // Predicated region
        $region49: #{tencoder_forward.3} parent=47 // pred_check
          %p714 = pneg %p191
        $region50: #{tencoder_forward.3} parent=47 // pred_check_branch
          %716 = sbr.rel (%p714) target = $region52
        $region51: #{tencoder_forward.3} parent=47 // pred_region
          %718 = vsyncadd %s711, 0
          %s719 = scalar_lea.hbm %s7, %s21
          %s721 = sshll.u32 %s713, 4
          %s722 = int_to_ptr.vmem [resolvable:$true] %s721
          %s723 = sshll.u32 %s719, 4
          %s724 = int_to_ptr.hbm [resolvable:$true] %s723
          %726 = dma.vmem_to_hbm [thread:$0]  %s722, 16, %s724, %s711
        $region52: #{tencoder_forward.3} parent=47 // pred_fallthru
          _
      $region48: #{tencoder_forward.3} parent=5 // pred_fallthru
        _
      %p727 = scmp.le.s32.totalorder 2, %s16
      // Predicated region
      $region53: #{tencoder_forward.3} parent=5 // pred_check
        %p728 = pneg %p727
      $region54: #{tencoder_forward.3} parent=5 // pred_check_branch
        %730 = sbr.rel (%p728) target = $region56
      $region55: #{tencoder_forward.3} parent=5 // pred_region
        %s731 = ssub.s32 %s16, 2
        // Predicated region
        $region57: #{tencoder_forward.3} parent=55 // pred_check
          %p732 = pneg %p197
        $region58: #{tencoder_forward.3} parent=55 // pred_check_branch
          %734 = sbr.rel (%p732) target = $region60
        $region59: #{tencoder_forward.3} parent=55 // pred_region
          %s735 = sand.u32 %s182, 1
          %s736 = scalar_lea.sflag [#allocation3], %s735
          %s737 = sand.u32 %s182, 1
          %s738 = scalar_lea.vmem [#allocation2], %s737
          %740 = dma.done %s736, 16
        $region60: #{tencoder_forward.3} parent=55 // pred_fallthru
          _
      $region56: #{tencoder_forward.3} parent=5 // pred_fallthru
        _
    $region6: #{tencoder_forward.3} parent=1 // loop_footer
      %s20 = sadd.s32 1, %s16
    $region7: #{tencoder_forward.3} parent=1 // loop_footer_branch
      %15 = sbr.rel target = $region3
    $region8: #{tencoder_forward.3} parent=1 // loop_exit
      _
    %741 = vsyncpa [#allocation3], 1
    %s742 = scalar_lea.sflag [#allocation3], 1
    %743 = vsyncpa %s742, 1

</llo_original>
